<compile_context>
chip_gen: v7x
topology: tpu7x:2x2x1
jax: 0.10.0
libtpu: 0.0.40
codegen_flags: <defaults>
</compile_context>

<pallas_src>
import numpy as np
import jax
import jax.numpy as jnp
from jax.experimental import pallas as pl
from jax.experimental.pallas import tpu as pltpu

LANE = 128


def _round_up(x, m):
    return ((x + m - 1) // m) * m


def _largest_tile(n_pad, target):
    """Largest multiple of 128 that divides n_pad and is <= target."""
    best = LANE
    t = LANE
    while t <= target:
        if n_pad % t == 0:
            best = t
        t += LANE
    return best


def _choose_padding_and_tiles(n):
    """Pick (n_pad, tm, tk).

    - tiles are multiples of 128 dividing n_pad (lane/sublane aligned, incl. int8 A)
    - tm up to 1024 / tk up to 2048: big tiles amortize per-step overhead and cut the
      (N/tm)-fold re-streaming of X/h1; the double-buffered working set stays ~7 MiB
      (A int8 2 MiB x2, hk/hm bf16, out/acc f32) -> fits every generation's scoped VMEM.
    - keep n_pad // tm >= 2 so the "parallel" row axis splits across v7x's 2 TCs.
    """
    n128 = _round_up(max(n, 1), LANE)
    if n128 <= LANE:
        return LANE, LANE, LANE
    n_pad = _round_up(n128, 2 * LANE)
    tm = _largest_tile(n_pad, 1024)
    if n_pad // tm < 2:
        tm = _largest_tile(n_pad, n_pad // 2)
    tk = _largest_tile(n_pad, 2048)
    return n_pad, tm, tk


def _compiler_params():
    # 32 MiB covers the larger tiles on v5e (16 MiB default scoped VMEM) and is within
    # the v6e/v7x scoped defaults / v7x 64 MiB physical budget.
    return pltpu.CompilerParams(
        dimension_semantics=("parallel", "arbitrary"),
        vmem_limit_bytes=32 * 1024 * 1024,
    )


# --------------------------------------------------------------------------
# Pallas kernels
# --------------------------------------------------------------------------
def _conv1_kernel(a_ref, xk_ref, xm_ref, dinv_ref, ws_ref, wa_ref, b_ref,
                  o_ref, acc_ref):
    """SAGEConvCat layer 1 + ReLU, tiled over (row block i, neighbor block k)."""
    k = pl.program_id(1)

    @pl.when(k == 0)
    def _():
        acc_ref[...] = jnp.zeros_like(acc_ref)

    # Unnormalized neighbor sum: acc += A_int8[i, k] @ X_bf16[k]  (bf16 MXU, f32 acc).
    acc_ref[...] += jnp.dot(a_ref[...].astype(jnp.bfloat16), xk_ref[...],
                            preferred_element_type=jnp.float32)

    @pl.when(k == pl.num_programs(1) - 1)
    def _():
        # mean aggregation: exact f32 1/deg scaling applied once at the epilogue.
        agg = (acc_ref[...] * dinv_ref[...]).astype(jnp.bfloat16)
        # concat([x_self, agg]) @ W_cat  ==  x_self @ W_self + agg @ W_agg
        h = (jnp.dot(xm_ref[...], ws_ref[...], preferred_element_type=jnp.float32)
             + jnp.dot(agg, wa_ref[...], preferred_element_type=jnp.float32)
             + b_ref[...])
        o_ref[...] = jnp.maximum(h, 0.0).astype(o_ref.dtype)   # bf16 out (feeds kernel B)


def _conv2_mlp_kernel(a_ref, hk_ref, hm_ref, dinv_ref, w2s_ref, w2a_ref, b2_ref,
                      wl1_ref, bl1_ref, wl2_ref, bl2_ref, wl3_ref, bl3_ref,
                      o_ref, acc_ref):
    """Fused: SAGEConvCat layer 2 + ReLU + lin1/ReLU + lin2/ReLU + lin3."""
    k = pl.program_id(1)

    @pl.when(k == 0)
    def _():
        acc_ref[...] = jnp.zeros_like(acc_ref)

    acc_ref[...] += jnp.dot(a_ref[...].astype(jnp.bfloat16), hk_ref[...],
                            preferred_element_type=jnp.float32)

    @pl.when(k == pl.num_programs(1) - 1)
    def _():
        agg = (acc_ref[...] * dinv_ref[...]).astype(jnp.bfloat16)
        h = (jnp.dot(hm_ref[...], w2s_ref[...], preferred_element_type=jnp.float32)
             + jnp.dot(agg, w2a_ref[...], preferred_element_type=jnp.float32)
             + b2_ref[...])
        h = jnp.maximum(h, 0.0)
        # TODO(synk): dropout(p=0.5) only applies when train_status=True; inference is identity.
        s = jnp.dot(h.astype(jnp.bfloat16), wl1_ref[...],
                    preferred_element_type=jnp.float32) + bl1_ref[...]
        s = jnp.maximum(s, 0.0)
        s = jnp.dot(s.astype(jnp.bfloat16), wl2_ref[...],
                    preferred_element_type=jnp.float32) + bl2_ref[...]
        s = jnp.maximum(s, 0.0)
        s = jnp.dot(s.astype(jnp.bfloat16), wl3_ref[...],
                    preferred_element_type=jnp.float32) + bl3_ref[...]
        o_ref[...] = s  # lane-padded [tm, 128]; only column 0 is meaningful


# --------------------------------------------------------------------------
# pallas_call wrappers
# --------------------------------------------------------------------------
def _conv1(a_i8, x_bf, dinv, ws1, wa1, b1, *, tm, tk):
    n_pad = a_i8.shape[0]
    f0p = x_bf.shape[1]
    f1p = ws1.shape[1]
    grid = (n_pad // tm, n_pad // tk)
    return pl.pallas_call(
        _conv1_kernel,
        out_shape=jax.ShapeDtypeStruct((n_pad, f1p), jnp.bfloat16),
        grid_spec=pltpu.PrefetchScalarGridSpec(
            num_scalar_prefetch=0,
            grid=grid,
            in_specs=[
                pl.BlockSpec((tm, tk), lambda i, k: (i, k)),       # A tile (int8 counts)
                pl.BlockSpec((tk, f0p), lambda i, k: (k, 0)),      # X neighbor k-block (bf16)
                pl.BlockSpec((tm, f0p), lambda i, k: (i, 0)),      # X self block (bf16)
                pl.BlockSpec((tm, 1), lambda i, k: (i, 0)),        # 1/deg (f32)
                pl.BlockSpec((f0p, f1p), lambda i, k: (0, 0)),     # W_self (bf16)
                pl.BlockSpec((f0p, f1p), lambda i, k: (0, 0)),     # W_agg (bf16)
                pl.BlockSpec((1, f1p), lambda i, k: (0, 0)),       # bias (f32)
            ],
            out_specs=pl.BlockSpec((tm, f1p), lambda i, k: (i, 0)),
            scratch_shapes=[pltpu.VMEM((tm, f0p), jnp.float32)],
        ),
        compiler_params=_compiler_params(),
    )(a_i8, x_bf, x_bf, dinv, ws1, wa1, b1)


def _conv2_mlp(a_i8, h_bf, dinv, w2s, w2a, b2, wl1, bl1, wl2, bl2, wl3, bl3, *, tm, tk):
    n_pad = a_i8.shape[0]
    f1p = h_bf.shape[1]
    f2p = w2s.shape[1]
    l1p = wl1.shape[1]
    l2p = wl2.shape[1]
    l3p = wl3.shape[1]
    grid = (n_pad // tm, n_pad // tk)
    return pl.pallas_call(
        _conv2_mlp_kernel,
        out_shape=jax.ShapeDtypeStruct((n_pad, l3p), jnp.float32),
        grid_spec=pltpu.PrefetchScalarGridSpec(
            num_scalar_prefetch=0,
            grid=grid,
            in_specs=[
                pl.BlockSpec((tm, tk), lambda i, k: (i, k)),       # A tile (int8 counts)
                pl.BlockSpec((tk, f1p), lambda i, k: (k, 0)),      # h1 neighbor k-block (bf16)
                pl.BlockSpec((tm, f1p), lambda i, k: (i, 0)),      # h1 self block (bf16)
                pl.BlockSpec((tm, 1), lambda i, k: (i, 0)),        # 1/deg (f32)
                pl.BlockSpec((f1p, f2p), lambda i, k: (0, 0)),     # W2_self (bf16)
                pl.BlockSpec((f1p, f2p), lambda i, k: (0, 0)),     # W2_agg (bf16)
                pl.BlockSpec((1, f2p), lambda i, k: (0, 0)),       # b2 (f32)
                pl.BlockSpec((f2p, l1p), lambda i, k: (0, 0)),     # lin1 (bf16)
                pl.BlockSpec((1, l1p), lambda i, k: (0, 0)),
                pl.BlockSpec((l1p, l2p), lambda i, k: (0, 0)),     # lin2 (bf16)
                pl.BlockSpec((1, l2p), lambda i, k: (0, 0)),
                pl.BlockSpec((l2p, l3p), lambda i, k: (0, 0)),     # lin3 (bf16, lane-padded out)
                pl.BlockSpec((1, l3p), lambda i, k: (0, 0)),
            ],
            out_specs=pl.BlockSpec((tm, l3p), lambda i, k: (i, 0)),
            scratch_shapes=[pltpu.VMEM((tm, f1p), jnp.float32)],
        ),
        compiler_params=_compiler_params(),
    )(a_i8, h_bf, h_bf, dinv, w2s, w2a, b2, wl1, bl1, wl2, bl2, wl3, bl3)


def _forward_impl(params, a_i8, dinv, x_bf, *, tm, tk):
    h1 = _conv1(a_i8, x_bf, dinv, params["ws1"], params["wa1"], params["b1"],
                tm=tm, tk=tk)                                   # bf16, fed directly to kernel B
    out = _conv2_mlp(a_i8, h1, dinv,
                     params["ws2"], params["wa2"], params["b2"],
                     params["wl1"], params["bl1"],
                     params["wl2"], params["bl2"],
                     params["wl3"], params["bl3"],
                     tm=tm, tk=tk)
    return out


# --------------------------------------------------------------------------
# Glue: edge_index -> dense int8 adjacency (edge counts) + f32 degree inverse
# --------------------------------------------------------------------------
def build_binary_adjacency(edge_index, num_nodes, num_nodes_pad):
    """Mimics SAGEConvCat message passing: remove self loops, add self loops,
    aggr='mean' (duplicate edges counted, matching PyG scatter-mean). A is stored as
    exact int8 counts; the 1/deg normalization is returned separately in f32."""
    src, dst = edge_index[0], edge_index[1]
    not_self = (src != dst).astype(jnp.float32)
    a = jnp.zeros((num_nodes, num_nodes), jnp.float32)
    a = a.at[dst, src].add(not_self)                        # remove self loops
    a = a + jnp.eye(num_nodes, dtype=jnp.float32)           # add self loops
    deg = jnp.sum(a, axis=1, keepdims=True)
    dinv = 1.0 / jnp.maximum(deg, 1.0)                      # exact f32 (padded rows -> 1.0 below)
    pad = num_nodes_pad - num_nodes
    a_pad = jnp.pad(a, ((0, pad), (0, pad)))
    dinv_pad = jnp.pad(dinv, ((0, pad), (0, 0)), constant_values=1.0)
    return a_pad.astype(jnp.int8), dinv_pad.astype(jnp.float32)


# --------------------------------------------------------------------------
# Parameter packing (done once at init: pre-transposed, zero-padded, bf16)
# --------------------------------------------------------------------------
def _pack_conv_weight_split(w, fin, fout, finp, foutp):
    """w: [Fout, 2*Fin] (PyTorch Linear over concat([x_self, agg]))
       -> (W_self, W_agg), each [Fin_pad, Fout_pad] bf16."""
    ws = jnp.zeros((finp, foutp), jnp.float32).at[:fin, :fout].set(w[:, :fin].T)
    wa = jnp.zeros((finp, foutp), jnp.float32).at[:fin, :fout].set(w[:, fin:].T)
    return ws.astype(jnp.bfloat16), wa.astype(jnp.bfloat16)


def _pack_linear_weight(w, fin, fout, finp, foutp):
    """w: [Fout, Fin] -> [Fin_pad, Fout_pad] bf16."""
    return jnp.zeros((finp, foutp), jnp.float32).at[:fin, :fout].set(w.T).astype(jnp.bfloat16)


def _pack_bias(b, fout, foutp):
    return jnp.zeros((1, foutp), jnp.float32).at[0, :fout].set(b)


# --------------------------------------------------------------------------
# Model
# --------------------------------------------------------------------------
class GCNRegressionPallas:
    """num_graph_conv_layers=2, num_lin_layers=3 configuration (GC-MERGE default)."""

    def __init__(self, key, graph_conv_layer_sizes, lin_hidden_sizes):
        g = graph_conv_layer_sizes
        l = lin_hidden_sizes
        assert len(g) == 3 and len(l) == 4
        assert l[0] == g[-1], "lin input must match conv output"

        keys = jax.random.split(key, 10)
        ki = iter(range(10))

        def init_linear(fan_out, fan_in):
            bound = 1.0 / jnp.sqrt(jnp.float32(fan_in))
            w = jax.random.uniform(keys[next(ki)], (fan_out, fan_in), jnp.float32, -bound, bound)
            b = jax.random.uniform(keys[next(ki)], (fan_out,), jnp.float32, -bound, bound)
            return w, b

        conv1_w, conv1_b = init_linear(g[1], 2 * g[0])   # SAGEConvCat(in,out) -> Linear(2*in,out)
        conv2_w, conv2_b = init_linear(g[2], 2 * g[1])
        lin1_w, lin1_b = init_linear(l[1], l[0])
        lin2_w, lin2_b = init_linear(l[2], l[1])
        lin3_w, lin3_b = init_linear(l[3], l[2])

        self.f0p = _round_up(g[0], LANE)
        f1p = _round_up(g[1], LANE)
        f2p = _round_up(g[2], LANE)
        l1p = _round_up(l[1], LANE)
        l2p = _round_up(l[2], LANE)
        l3p = _round_up(l[3], LANE)
        self.num_feat = g[0]

        ws1, wa1 = _pack_conv_weight_split(conv1_w, g[0], g[1], self.f0p, f1p)
        ws2, wa2 = _pack_conv_weight_split(conv2_w, g[1], g[2], f1p, f2p)

        # All transposes / slices / padding / bf16 casts hoisted out of the per-forward path.
        self.params = {
            "ws1": ws1, "wa1": wa1, "b1": _pack_bias(conv1_b, g[1], f1p),
            "ws2": ws2, "wa2": wa2, "b2": _pack_bias(conv2_b, g[2], f2p),
            "wl1": _pack_linear_weight(lin1_w, l[0], l[1], f2p, l1p),
            "bl1": _pack_bias(lin1_b, l[1], l1p),
            "wl2": _pack_linear_weight(lin2_w, l[1], l[2], l1p, l2p),
            "bl2": _pack_bias(lin2_b, l[2], l2p),
            "wl3": _pack_linear_weight(lin3_w, l[2], l[3], l2p, l3p),
            "bl3": _pack_bias(lin3_b, l[3], l3p),
        }

        # Raw f32 weights kept for the pure-JAX reference check.
        self.raw = {
            "conv1_w": conv1_w, "conv1_b": conv1_b,
            "conv2_w": conv2_w, "conv2_b": conv2_b,
            "lin1_w": lin1_w, "lin1_b": lin1_b,
            "lin2_w": lin2_w, "lin2_b": lin2_b,
            "lin3_w": lin3_w, "lin3_b": lin3_b,
        }

        self._adj_cache = None
        self._forward_jit = jax.jit(_forward_impl, static_argnames=("tm", "tk"))

    def _cached_adjacency(self, edge_index, n, n_pad):
        # Key on edge_index CONTENT (shape + bytes), not Python id, to avoid stale hits.
        ei = np.asarray(jax.device_get(edge_index))
        key = (n, n_pad, ei.shape, ei.dtype.str, hash(ei.tobytes()))
        if self._adj_cache is None or self._adj_cache[0] != key:
            self._adj_cache = (key, build_binary_adjacency(edge_index, n, n_pad))
        return self._adj_cache[1]

    def forward(self, x, edge_index, train_status=False):
        del train_status  # inference path; dropout is identity
        n = x.shape[0]
        n_pad, tm, tk = _choose_padding_and_tiles(n)
        a_i8, dinv = self._cached_adjacency(edge_index, n, n_pad)
        xp = jnp.pad(x.astype(jnp.float32),
                     ((0, n_pad - n), (0, self.f0p - self.num_feat))).astype(jnp.bfloat16)
        out = self._forward_jit(self.params, a_i8, dinv, xp, tm=tm, tk=tk)
        return out[:n, 0]                                   # squeeze to [N]


# --------------------------------------------------------------------------
# Pure-JAX f32 reference (for correctness check only)
# --------------------------------------------------------------------------
def _reference_forward(raw, x, edge_index):
    n = x.shape[0]
    src, dst = edge_index[0], edge_index[1]
    not_self = (src != dst).astype(jnp.float32)
    a = jnp.zeros((n, n), jnp.float32).at[dst, src].add(not_self) + jnp.eye(n)
    a = a / jnp.maximum(a.sum(axis=1, keepdims=True), 1.0)

    def sage(h, w, b):
        fin = h.shape[1]
        agg = a @ h
        return jax.nn.relu(h @ w[:, :fin].T + agg @ w[:, fin:].T + b)

    h = sage(x, raw["conv1_w"], raw["conv1_b"])
    h = sage(h, raw["conv2_w"], raw["conv2_b"])
    s = jax.nn.relu(h @ raw["lin1_w"].T + raw["lin1_b"])
    s = jax.nn.relu(s @ raw["lin2_w"].T + raw["lin2_b"])
    s = s @ raw["lin3_w"].T + raw["lin3_b"]
    return s[:, 0]


# --------------------------------------------------------------------------
# Main
# --------------------------------------------------------------------------
if __name__ == "__main__":
    key = jax.random.PRNGKey(0)
    k_x, k_e, k_p = jax.random.split(key, 3)

    num_nodes = 32
    num_feat = 16
    hidden = 32
    num_edges = 64

    graph_conv_layer_sizes = [num_feat, hidden, hidden]
    lin_hidden_sizes = [hidden, hidden, hidden, 1]

    x = jax.random.normal(k_x, (num_nodes, num_feat), jnp.float32)
    edge_index = jax.random.randint(k_e, (2, num_edges), 0, num_nodes, jnp.int32)

    model = GCNRegressionPallas(k_p, graph_conv_layer_sizes, lin_hidden_sizes)
    scores = model.forward(x, edge_index, train_status=False)
    jax.block_until_ready(scores)

    assert scores.shape == (num_nodes,)
    assert scores.dtype == jnp.float32
    assert bool(jnp.all(jnp.isfinite(scores)))

    ref = _reference_forward(model.raw, x, edge_index)
    max_err = float(jnp.max(jnp.abs(scores - ref)))
    assert max_err < 0.1, f"max abs error vs f32 reference: {max_err}"

    print("KERNEL_OK")
</pallas_src>

<mosaic_0001>
module attributes {stable_mosaic.version = 11 : i64} {
  func.func @_conv2_mlp_kernel(%arg0: i32, %arg1: i32, %arg2: memref<128x128xi8, #tpu.memory_space<vmem>>, %arg3: memref<128x128xbf16, #tpu.memory_space<vmem>>, %arg4: memref<128x128xbf16, #tpu.memory_space<vmem>>, %arg5: memref<128x1xf32, #tpu.memory_space<vmem>>, %arg6: memref<128x128xbf16, #tpu.memory_space<vmem>>, %arg7: memref<128x128xbf16, #tpu.memory_space<vmem>>, %arg8: memref<1x128xf32, #tpu.memory_space<vmem>>, %arg9: memref<128x128xbf16, #tpu.memory_space<vmem>>, %arg10: memref<1x128xf32, #tpu.memory_space<vmem>>, %arg11: memref<128x128xbf16, #tpu.memory_space<vmem>>, %arg12: memref<1x128xf32, #tpu.memory_space<vmem>>, %arg13: memref<128x128xbf16, #tpu.memory_space<vmem>>, %arg14: memref<1x128xf32, #tpu.memory_space<vmem>>, %arg15: memref<128x128xf32, #tpu.memory_space<vmem>>, %arg16: memref<128x128xf32, #tpu.memory_space<vmem>>) attributes {dimension_semantics = [#tpu.dimension_semantics<parallel>, #tpu.dimension_semantics<arbitrary>], iteration_bounds = array<i64: 1, 1>, scalar_prefetch = 0 : i64, scratch_operands = 1 : i64, tpu.core_type = #tpu.core_type<tc>, window_params = [{transform_indices = @transform_0, window_bounds = array<i64: 128, 128>}, {transform_indices = @transform_1, window_bounds = array<i64: 128, 128>}, {transform_indices = @transform_2, window_bounds = array<i64: 128, 128>}, {transform_indices = @transform_3, window_bounds = array<i64: 128, 1>}, {pipeline_mode = #tpu.pipeline_mode<synchronous>, transform_indices = @transform_4, window_bounds = array<i64: 128, 128>}, {pipeline_mode = #tpu.pipeline_mode<synchronous>, transform_indices = @transform_5, window_bounds = array<i64: 128, 128>}, {pipeline_mode = #tpu.pipeline_mode<synchronous>, transform_indices = @transform_6, window_bounds = array<i64: 1, 128>}, {pipeline_mode = #tpu.pipeline_mode<synchronous>, transform_indices = @transform_7, window_bounds = array<i64: 128, 128>}, {pipeline_mode = #tpu.pipeline_mode<synchronous>, transform_indices = @transform_8, window_bounds = array<i64: 1, 128>}, {pipeline_mode = #tpu.pipeline_mode<synchronous>, transform_indices = @transform_9, window_bounds = array<i64: 128, 128>}, {pipeline_mode = #tpu.pipeline_mode<synchronous>, transform_indices = @transform_10, window_bounds = array<i64: 1, 128>}, {pipeline_mode = #tpu.pipeline_mode<synchronous>, transform_indices = @transform_11, window_bounds = array<i64: 128, 128>}, {pipeline_mode = #tpu.pipeline_mode<synchronous>, transform_indices = @transform_12, window_bounds = array<i64: 1, 128>}, {transform_indices = @transform_13, window_bounds = array<i64: 128, 128>}]} {
    %c0_i32 = arith.constant 0 : i32
    %0 = arith.cmpi eq, %arg1, %c0_i32 : i32
    %1 = arith.extui %0 : i1 to i32
    %c0_i32_0 = arith.constant 0 : i32
    %2 = arith.cmpi ne, %1, %c0_i32_0 : i32
    scf.if %2 {
      %cst_10 = arith.constant 0.000000e+00 : f32
      %13 = vector.broadcast %cst_10 : f32 to vector<128x128xf32>
      %c0_11 = arith.constant 0 : index
      %c0_12 = arith.constant 0 : index
      %14 = vector.load %arg16[%c0_11, %c0_12] : memref<128x128xf32, #tpu.memory_space<vmem>>, vector<128x128xf32>
      tpu.vector_store %arg16[%c0_11, %c0_12], %13 {strides = array<i32>} : memref<128x128xf32, #tpu.memory_space<vmem>>, vector<128x128xf32>,
    } else {
    }
    %c0 = arith.constant 0 : index
    %c0_1 = arith.constant 0 : index
    %3 = vector.load %arg16[%c0, %c0_1] : memref<128x128xf32, #tpu.memory_space<vmem>>, vector<128x128xf32>
    %c0_2 = arith.constant 0 : index
    %c0_3 = arith.constant 0 : index
    %4 = vector.load %arg2[%c0_2, %c0_3] : memref<128x128xi8, #tpu.memory_space<vmem>>, vector<128x128xi8>
    %5 = arith.sitofp %4 : vector<128x128xi8> to vector<128x128xbf16>
    %c0_4 = arith.constant 0 : index
    %c0_5 = arith.constant 0 : index
    %6 = vector.load %arg3[%c0_4, %c0_5] : memref<128x128xbf16, #tpu.memory_space<vmem>>, vector<128x128xbf16>
    %cst = arith.constant dense<0.000000e+00> : vector<128x128xf32>
    %7 = tpu.matmul %5, %6, %cst {dimension_numbers = #tpu.dot_dimension_numbers<[1], [0], [0], [1], [0, 0, 1, 1], [], []>} : vector<128x128xbf16>, vector<128x128xbf16>, vector<128x128xf32> -> vector<128x128xf32>
    %8 = arith.addf %3, %7 : vector<128x128xf32>
    %c0_6 = arith.constant 0 : index
    %c0_7 = arith.constant 0 : index
    %9 = vector.load %arg16[%c0_6, %c0_7] : memref<128x128xf32, #tpu.memory_space<vmem>>, vector<128x128xf32>
    tpu.vector_store %arg16[%c0_6, %c0_7], %8 {strides = array<i32>} : memref<128x128xf32, #tpu.memory_space<vmem>>, vector<128x128xf32>,
    %c0_i32_8 = arith.constant 0 : i32
    %10 = arith.cmpi eq, %arg1, %c0_i32_8 : i32
    %11 = arith.extui %10 : i1 to i32
    %c0_i32_9 = arith.constant 0 : i32
    %12 = arith.cmpi ne, %11, %c0_i32_9 : i32
    scf.if %12 {
      %c0_10 = arith.constant 0 : index
      %c0_11 = arith.constant 0 : index
      %13 = vector.load %arg16[%c0_10, %c0_11] : memref<128x128xf32, #tpu.memory_space<vmem>>, vector<128x128xf32>
      %c0_12 = arith.constant 0 : index
      %c0_13 = arith.constant 0 : index
      %14 = vector.load %arg5[%c0_12, %c0_13] : memref<128x1xf32, #tpu.memory_space<vmem>>, vector<128x1xf32>
      %15 = vector.broadcast %14 : vector<128x1xf32> to vector<128x128xf32>
      %16 = arith.mulf %13, %15 : vector<128x128xf32>
      %17 = arith.truncf %16 : vector<128x128xf32> to vector<128x128xbf16>
      %c0_14 = arith.constant 0 : index
      %c0_15 = arith.constant 0 : index
      %18 = vector.load %arg4[%c0_14, %c0_15] : memref<128x128xbf16, #tpu.memory_space<vmem>>, vector<128x128xbf16>
      %c0_16 = arith.constant 0 : index
      %c0_17 = arith.constant 0 : index
      %19 = vector.load %arg6[%c0_16, %c0_17] : memref<128x128xbf16, #tpu.memory_space<vmem>>, vector<128x128xbf16>
      %cst_18 = arith.constant dense<0.000000e+00> : vector<128x128xf32>
      %20 = tpu.matmul %18, %19, %cst_18 {dimension_numbers = #tpu.dot_dimension_numbers<[1], [0], [0], [1], [0, 0, 1, 1], [], []>} : vector<128x128xbf16>, vector<128x128xbf16>, vector<128x128xf32> -> vector<128x128xf32>
      %c0_19 = arith.constant 0 : index
      %c0_20 = arith.constant 0 : index
      %21 = vector.load %arg7[%c0_19, %c0_20] : memref<128x128xbf16, #tpu.memory_space<vmem>>, vector<128x128xbf16>
      %cst_21 = arith.constant dense<0.000000e+00> : vector<128x128xf32>
      %22 = tpu.matmul %17, %21, %cst_21 {dimension_numbers = #tpu.dot_dimension_numbers<[1], [0], [0], [1], [0, 0, 1, 1], [], []>} : vector<128x128xbf16>, vector<128x128xbf16>, vector<128x128xf32> -> vector<128x128xf32>
      %23 = arith.addf %20, %22 : vector<128x128xf32>
      %c0_22 = arith.constant 0 : index
      %c0_23 = arith.constant 0 : index
      %24 = vector.load %arg8[%c0_22, %c0_23] : memref<1x128xf32, #tpu.memory_space<vmem>>, vector<1x128xf32>
      %25 = vector.broadcast %24 : vector<1x128xf32> to vector<128x128xf32>
      %26 = arith.addf %23, %25 : vector<128x128xf32>
      %cst_24 = arith.constant 0.000000e+00 : f32
      %27 = vector.broadcast %cst_24 : f32 to vector<128x128xf32>
      %28 = arith.maximumf %26, %27 : vector<128x128xf32>
      %29 = arith.truncf %28 : vector<128x128xf32> to vector<128x128xbf16>
      %c0_25 = arith.constant 0 : index
      %c0_26 = arith.constant 0 : index
      %30 = vector.load %arg9[%c0_25, %c0_26] : memref<128x128xbf16, #tpu.memory_space<vmem>>, vector<128x128xbf16>
      %cst_27 = arith.constant dense<0.000000e+00> : vector<128x128xf32>
      %31 = tpu.matmul %29, %30, %cst_27 {dimension_numbers = #tpu.dot_dimension_numbers<[1], [0], [0], [1], [0, 0, 1, 1], [], []>} : vector<128x128xbf16>, vector<128x128xbf16>, vector<128x128xf32> -> vector<128x128xf32>
      %c0_28 = arith.constant 0 : index
      %c0_29 = arith.constant 0 : index
      %32 = vector.load %arg10[%c0_28, %c0_29] : memref<1x128xf32, #tpu.memory_space<vmem>>, vector<1x128xf32>
      %33 = vector.broadcast %32 : vector<1x128xf32> to vector<128x128xf32>
      %34 = arith.addf %31, %33 : vector<128x128xf32>
      %cst_30 = arith.constant 0.000000e+00 : f32
      %35 = vector.broadcast %cst_30 : f32 to vector<128x128xf32>
      %36 = arith.maximumf %34, %35 : vector<128x128xf32>
      %37 = arith.truncf %36 : vector<128x128xf32> to vector<128x128xbf16>
      %c0_31 = arith.constant 0 : index
      %c0_32 = arith.constant 0 : index
      %38 = vector.load %arg11[%c0_31, %c0_32] : memref<128x128xbf16, #tpu.memory_space<vmem>>, vector<128x128xbf16>
      %cst_33 = arith.constant dense<0.000000e+00> : vector<128x128xf32>
      %39 = tpu.matmul %37, %38, %cst_33 {dimension_numbers = #tpu.dot_dimension_numbers<[1], [0], [0], [1], [0, 0, 1, 1], [], []>} : vector<128x128xbf16>, vector<128x128xbf16>, vector<128x128xf32> -> vector<128x128xf32>
      %c0_34 = arith.constant 0 : index
      %c0_35 = arith.constant 0 : index
      %40 = vector.load %arg12[%c0_34, %c0_35] : memref<1x128xf32, #tpu.memory_space<vmem>>, vector<1x128xf32>
      %41 = vector.broadcast %40 : vector<1x128xf32> to vector<128x128xf32>
      %42 = arith.addf %39, %41 : vector<128x128xf32>
      %cst_36 = arith.constant 0.000000e+00 : f32
      %43 = vector.broadcast %cst_36 : f32 to vector<128x128xf32>
      %44 = arith.maximumf %42, %43 : vector<128x128xf32>
      %45 = arith.truncf %44 : vector<128x128xf32> to vector<128x128xbf16>
      %c0_37 = arith.constant 0 : index
      %c0_38 = arith.constant 0 : index
      %46 = vector.load %arg13[%c0_37, %c0_38] : memref<128x128xbf16, #tpu.memory_space<vmem>>, vector<128x128xbf16>
      %cst_39 = arith.constant dense<0.000000e+00> : vector<128x128xf32>
      %47 = tpu.matmul %45, %46, %cst_39 {dimension_numbers = #tpu.dot_dimension_numbers<[1], [0], [0], [1], [0, 0, 1, 1], [], []>} : vector<128x128xbf16>, vector<128x128xbf16>, vector<128x128xf32> -> vector<128x128xf32>
      %c0_40 = arith.constant 0 : index
      %c0_41 = arith.constant 0 : index
      %48 = vector.load %arg14[%c0_40, %c0_41] : memref<1x128xf32, #tpu.memory_space<vmem>>, vector<1x128xf32>
      %49 = vector.broadcast %48 : vector<1x128xf32> to vector<128x128xf32>
      %50 = arith.addf %47, %49 : vector<128x128xf32>
      %c0_42 = arith.constant 0 : index
      %c0_43 = arith.constant 0 : index
      %51 = vector.load %arg15[%c0_42, %c0_43] : memref<128x128xf32, #tpu.memory_space<vmem>>, vector<128x128xf32>
      tpu.vector_store %arg15[%c0_42, %c0_43], %50 {strides = array<i32>} : memref<128x128xf32, #tpu.memory_space<vmem>>, vector<128x128xf32>,
    } else {
    }
    return
  }
  func.func @transform_0(%arg0: i32, %arg1: i32) -> (i32, i32) {
    %c0_i32 = arith.constant 0 : i32
    return %arg0, %arg1 : i32, i32
  }
  func.func @transform_1(%arg0: i32, %arg1: i32) -> (i32, i32) {
    %c0_i32 = arith.constant 0 : i32
    %c0_i32_0 = arith.constant 0 : i32
    return %arg1, %c0_i32 : i32, i32
  }
  func.func @transform_2(%arg0: i32, %arg1: i32) -> (i32, i32) {
    %c0_i32 = arith.constant 0 : i32
    %c0_i32_0 = arith.constant 0 : i32
    return %arg0, %c0_i32 : i32, i32
  }
  func.func @transform_3(%arg0: i32, %arg1: i32) -> (i32, i32) {
    %c0_i32 = arith.constant 0 : i32
    %c0_i32_0 = arith.constant 0 : i32
    return %arg0, %c0_i32 : i32, i32
  }
  func.func @transform_4(%arg0: i32, %arg1: i32) -> (i32, i32) {
    %c0_i32 = arith.constant 0 : i32
    %c0_i32_0 = arith.constant 0 : i32
    %c0_i32_1 = arith.constant 0 : i32
    return %c0_i32, %c0_i32_0 : i32, i32
  }
  func.func @transform_5(%arg0: i32, %arg1: i32) -> (i32, i32) {
    %c0_i32 = arith.constant 0 : i32
    %c0_i32_0 = arith.constant 0 : i32
    %c0_i32_1 = arith.constant 0 : i32
    return %c0_i32, %c0_i32_0 : i32, i32
  }
  func.func @transform_6(%arg0: i32, %arg1: i32) -> (i32, i32) {
    %c0_i32 = arith.constant 0 : i32
    %c0_i32_0 = arith.constant 0 : i32
    %c0_i32_1 = arith.constant 0 : i32
    return %c0_i32, %c0_i32_0 : i32, i32
  }
  func.func @transform_7(%arg0: i32, %arg1: i32) -> (i32, i32) {
    %c0_i32 = arith.constant 0 : i32
    %c0_i32_0 = arith.constant 0 : i32
    %c0_i32_1 = arith.constant 0 : i32
    return %c0_i32, %c0_i32_0 : i32, i32
  }
  func.func @transform_8(%arg0: i32, %arg1: i32) -> (i32, i32) {
    %c0_i32 = arith.constant 0 : i32
    %c0_i32_0 = arith.constant 0 : i32
    %c0_i32_1 = arith.constant 0 : i32
    return %c0_i32, %c0_i32_0 : i32, i32
  }
  func.func @transform_9(%arg0: i32, %arg1: i32) -> (i32, i32) {
    %c0_i32 = arith.constant 0 : i32
    %c0_i32_0 = arith.constant 0 : i32
    %c0_i32_1 = arith.constant 0 : i32
    return %c0_i32, %c0_i32_0 : i32, i32
  }
  func.func @transform_10(%arg0: i32, %arg1: i32) -> (i32, i32) {
    %c0_i32 = arith.constant 0 : i32
    %c0_i32_0 = arith.constant 0 : i32
    %c0_i32_1 = arith.constant 0 : i32
    return %c0_i32, %c0_i32_0 : i32, i32
  }
  func.func @transform_11(%arg0: i32, %arg1: i32) -> (i32, i32) {
    %c0_i32 = arith.constant 0 : i32
    %c0_i32_0 = arith.constant 0 : i32
    %c0_i32_1 = arith.constant 0 : i32
    return %c0_i32, %c0_i32_0 : i32, i32
  }
  func.func @transform_12(%arg0: i32, %arg1: i32) -> (i32, i32) {
    %c0_i32 = arith.constant 0 : i32
    %c0_i32_0 = arith.constant 0 : i32
    %c0_i32_1 = arith.constant 0 : i32
    return %c0_i32, %c0_i32_0 : i32, i32
  }
  func.func @transform_13(%arg0: i32, %arg1: i32) -> (i32, i32) {
    %c0_i32 = arith.constant 0 : i32
    %c0_i32_0 = arith.constant 0 : i32
    return %arg0, %c0_i32 : i32, i32
  }
}

module attributes {stable_mosaic.version = 11 : i64} {
  func.func @_conv1_kernel(%arg0: i32, %arg1: i32, %arg2: memref<128x128xi8, #tpu.memory_space<vmem>>, %arg3: memref<128x128xbf16, #tpu.memory_space<vmem>>, %arg4: memref<128x128xbf16, #tpu.memory_space<vmem>>, %arg5: memref<128x1xf32, #tpu.memory_space<vmem>>, %arg6: memref<128x128xbf16, #tpu.memory_space<vmem>>, %arg7: memref<128x128xbf16, #tpu.memory_space<vmem>>, %arg8: memref<1x128xf32, #tpu.memory_space<vmem>>, %arg9: memref<128x128xbf16, #tpu.memory_space<vmem>>, %arg10: memref<128x128xf32, #tpu.memory_space<vmem>>) attributes {dimension_semantics = [#tpu.dimension_semantics<parallel>, #tpu.dimension_semantics<arbitrary>], iteration_bounds = array<i64: 1, 1>, scalar_prefetch = 0 : i64, scratch_operands = 1 : i64, tpu.core_type = #tpu.core_type<tc>, window_params = [{transform_indices = @transform_0, window_bounds = array<i64: 128, 128>}, {transform_indices = @transform_1, window_bounds = array<i64: 128, 128>}, {transform_indices = @transform_2, window_bounds = array<i64: 128, 128>}, {transform_indices = @transform_3, window_bounds = array<i64: 128, 1>}, {pipeline_mode = #tpu.pipeline_mode<synchronous>, transform_indices = @transform_4, window_bounds = array<i64: 128, 128>}, {pipeline_mode = #tpu.pipeline_mode<synchronous>, transform_indices = @transform_5, window_bounds = array<i64: 128, 128>}, {pipeline_mode = #tpu.pipeline_mode<synchronous>, transform_indices = @transform_6, window_bounds = array<i64: 1, 128>}, {transform_indices = @transform_7, window_bounds = array<i64: 128, 128>}]} {
    %c0_i32 = arith.constant 0 : i32
    %0 = arith.cmpi eq, %arg1, %c0_i32 : i32
    %1 = arith.extui %0 : i1 to i32
    %c0_i32_0 = arith.constant 0 : i32
    %2 = arith.cmpi ne, %1, %c0_i32_0 : i32
    scf.if %2 {
      %cst_10 = arith.constant 0.000000e+00 : f32
      %13 = vector.broadcast %cst_10 : f32 to vector<128x128xf32>
      %c0_11 = arith.constant 0 : index
      %c0_12 = arith.constant 0 : index
      %14 = vector.load %arg10[%c0_11, %c0_12] : memref<128x128xf32, #tpu.memory_space<vmem>>, vector<128x128xf32>
      tpu.vector_store %arg10[%c0_11, %c0_12], %13 {strides = array<i32>} : memref<128x128xf32, #tpu.memory_space<vmem>>, vector<128x128xf32>,
    } else {
    }
    %c0 = arith.constant 0 : index
    %c0_1 = arith.constant 0 : index
    %3 = vector.load %arg10[%c0, %c0_1] : memref<128x128xf32, #tpu.memory_space<vmem>>, vector<128x128xf32>
    %c0_2 = arith.constant 0 : index
    %c0_3 = arith.constant 0 : index
    %4 = vector.load %arg2[%c0_2, %c0_3] : memref<128x128xi8, #tpu.memory_space<vmem>>, vector<128x128xi8>
    %5 = arith.sitofp %4 : vector<128x128xi8> to vector<128x128xbf16>
    %c0_4 = arith.constant 0 : index
    %c0_5 = arith.constant 0 : index
    %6 = vector.load %arg3[%c0_4, %c0_5] : memref<128x128xbf16, #tpu.memory_space<vmem>>, vector<128x128xbf16>
    %cst = arith.constant dense<0.000000e+00> : vector<128x128xf32>
    %7 = tpu.matmul %5, %6, %cst {dimension_numbers = #tpu.dot_dimension_numbers<[1], [0], [0], [1], [0, 0, 1, 1], [], []>} : vector<128x128xbf16>, vector<128x128xbf16>, vector<128x128xf32> -> vector<128x128xf32>
    %8 = arith.addf %3, %7 : vector<128x128xf32>
    %c0_6 = arith.constant 0 : index
    %c0_7 = arith.constant 0 : index
    %9 = vector.load %arg10[%c0_6, %c0_7] : memref<128x128xf32, #tpu.memory_space<vmem>>, vector<128x128xf32>
    tpu.vector_store %arg10[%c0_6, %c0_7], %8 {strides = array<i32>} : memref<128x128xf32, #tpu.memory_space<vmem>>, vector<128x128xf32>,
    %c0_i32_8 = arith.constant 0 : i32
    %10 = arith.cmpi eq, %arg1, %c0_i32_8 : i32
    %11 = arith.extui %10 : i1 to i32
    %c0_i32_9 = arith.constant 0 : i32
    %12 = arith.cmpi ne, %11, %c0_i32_9 : i32
    scf.if %12 {
      %c0_10 = arith.constant 0 : index
      %c0_11 = arith.constant 0 : index
      %13 = vector.load %arg10[%c0_10, %c0_11] : memref<128x128xf32, #tpu.memory_space<vmem>>, vector<128x128xf32>
      %c0_12 = arith.constant 0 : index
      %c0_13 = arith.constant 0 : index
      %14 = vector.load %arg5[%c0_12, %c0_13] : memref<128x1xf32, #tpu.memory_space<vmem>>, vector<128x1xf32>
      %15 = vector.broadcast %14 : vector<128x1xf32> to vector<128x128xf32>
      %16 = arith.mulf %13, %15 : vector<128x128xf32>
      %17 = arith.truncf %16 : vector<128x128xf32> to vector<128x128xbf16>
      %c0_14 = arith.constant 0 : index
      %c0_15 = arith.constant 0 : index
      %18 = vector.load %arg4[%c0_14, %c0_15] : memref<128x128xbf16, #tpu.memory_space<vmem>>, vector<128x128xbf16>
      %c0_16 = arith.constant 0 : index
      %c0_17 = arith.constant 0 : index
      %19 = vector.load %arg6[%c0_16, %c0_17] : memref<128x128xbf16, #tpu.memory_space<vmem>>, vector<128x128xbf16>
      %cst_18 = arith.constant dense<0.000000e+00> : vector<128x128xf32>
      %20 = tpu.matmul %18, %19, %cst_18 {dimension_numbers = #tpu.dot_dimension_numbers<[1], [0], [0], [1], [0, 0, 1, 1], [], []>} : vector<128x128xbf16>, vector<128x128xbf16>, vector<128x128xf32> -> vector<128x128xf32>
      %c0_19 = arith.constant 0 : index
      %c0_20 = arith.constant 0 : index
      %21 = vector.load %arg7[%c0_19, %c0_20] : memref<128x128xbf16, #tpu.memory_space<vmem>>, vector<128x128xbf16>
      %cst_21 = arith.constant dense<0.000000e+00> : vector<128x128xf32>
      %22 = tpu.matmul %17, %21, %cst_21 {dimension_numbers = #tpu.dot_dimension_numbers<[1], [0], [0], [1], [0, 0, 1, 1], [], []>} : vector<128x128xbf16>, vector<128x128xbf16>, vector<128x128xf32> -> vector<128x128xf32>
      %23 = arith.addf %20, %22 : vector<128x128xf32>
      %c0_22 = arith.constant 0 : index
      %c0_23 = arith.constant 0 : index
      %24 = vector.load %arg8[%c0_22, %c0_23] : memref<1x128xf32, #tpu.memory_space<vmem>>, vector<1x128xf32>
      %25 = vector.broadcast %24 : vector<1x128xf32> to vector<128x128xf32>
      %26 = arith.addf %23, %25 : vector<128x128xf32>
      %cst_24 = arith.constant 0.000000e+00 : f32
      %27 = vector.broadcast %cst_24 : f32 to vector<128x128xf32>
      %28 = arith.maximumf %26, %27 : vector<128x128xf32>
      %29 = arith.truncf %28 : vector<128x128xf32> to vector<128x128xbf16>
      %c0_25 = arith.constant 0 : index
      %c0_26 = arith.constant 0 : index
      %30 = vector.load %arg9[%c0_25, %c0_26] : memref<128x128xbf16, #tpu.memory_space<vmem>>, vector<128x128xbf16>
      tpu.vector_store %arg9[%c0_25, %c0_26], %29 {strides = array<i32>} : memref<128x128xbf16, #tpu.memory_space<vmem>>, vector<128x128xbf16>,
    } else {
    }
    return
  }
  func.func @transform_0(%arg0: i32, %arg1: i32) -> (i32, i32) {
    %c0_i32 = arith.constant 0 : i32
    return %arg0, %arg1 : i32, i32
  }
  func.func @transform_1(%arg0: i32, %arg1: i32) -> (i32, i32) {
    %c0_i32 = arith.constant 0 : i32
    %c0_i32_0 = arith.constant 0 : i32
    return %arg1, %c0_i32 : i32, i32
  }
  func.func @transform_2(%arg0: i32, %arg1: i32) -> (i32, i32) {
    %c0_i32 = arith.constant 0 : i32
    %c0_i32_0 = arith.constant 0 : i32
    return %arg0, %c0_i32 : i32, i32
  }
  func.func @transform_3(%arg0: i32, %arg1: i32) -> (i32, i32) {
    %c0_i32 = arith.constant 0 : i32
    %c0_i32_0 = arith.constant 0 : i32
    return %arg0, %c0_i32 : i32, i32
  }
  func.func @transform_4(%arg0: i32, %arg1: i32) -> (i32, i32) {
    %c0_i32 = arith.constant 0 : i32
    %c0_i32_0 = arith.constant 0 : i32
    %c0_i32_1 = arith.constant 0 : i32
    return %c0_i32, %c0_i32_0 : i32, i32
  }
  func.func @transform_5(%arg0: i32, %arg1: i32) -> (i32, i32) {
    %c0_i32 = arith.constant 0 : i32
    %c0_i32_0 = arith.constant 0 : i32
    %c0_i32_1 = arith.constant 0 : i32
    return %c0_i32, %c0_i32_0 : i32, i32
  }
  func.func @transform_6(%arg0: i32, %arg1: i32) -> (i32, i32) {
    %c0_i32 = arith.constant 0 : i32
    %c0_i32_0 = arith.constant 0 : i32
    %c0_i32_1 = arith.constant 0 : i32
    return %c0_i32, %c0_i32_0 : i32, i32
  }
  func.func @transform_7(%arg0: i32, %arg1: i32) -> (i32, i32) {
    %c0_i32 = arith.constant 0 : i32
    %c0_i32_0 = arith.constant 0 : i32
    return %arg0, %c0_i32 : i32, i32
  }
}

</mosaic_0001>

<llo_original>
// kernel: _forward_impl.2
$region0: #{_forward_impl.2}
  #allocation0 [shape = 'u32[]', space=smem, size = 0x4, offset = 0x4, fixed_abs, tag = 'smem constant byte address 0x4 - core index']
  #allocation1 [shape = 'u32[144,128]{1,0:T(1,128)}', space=vmem, size = 0x12000, scoped, tag = 'internal scratch']
  #allocation2 [shape = 'f32[128,128]{1,0:T(8,128)}', space=vmem, size = 0x10000, scoped, tag = 'scratch operand']
  %s0 = inlined_call_operand.vmem [shape: s8[128,128], index: 0, kind: input, shape index: {}]
  %s1 = inlined_call_operand.vmem [shape: bf16[128,128], index: 1, kind: input, shape index: {}, may-alias: {1,2}]
  %s2 = inlined_call_operand.vmem [shape: bf16[128,128], index: 2, kind: input, shape index: {}, may-alias: {1,2}]
  %s3 = inlined_call_operand.vmem [shape: f32[128,1], index: 3, kind: input, shape index: {}]
  %s4 = inlined_call_operand.vmem [shape: bf16[128,128], index: 4, kind: input, shape index: {}]
  %s5 = inlined_call_operand.hbm [shape: bf16[128,128], index: 5, kind: input, shape index: {}]
  %s6 = inlined_call_operand.vmem [shape: f32[1,128], index: 6, kind: input, shape index: {}]
  %s7 = inlined_call_operand.vmem [shape: bf16[128,128], index: 7, kind: output, shape index: {}]
  %s8 = sld [smem:[#allocation0]]
  $region50: #{_forward_impl.2} parent=0
    _
  %s10 = ssub.s32 1, %s8
  %s11 = scalar_select 0, %s10, %s8
  $region1: #{_forward_impl.2} parent=0
    #allocation3 [shape = 'u8[32768]{0}', space=vmem, size = 0x8000, scoped, tag = 'input window, operand 5, single buffered']
    #allocation4 [shape = 's32[1]{0}', space=sflag, size = 0x4, scoped, tag = 'scoped memory for _forward_impl.2']
    %12 = vsyncpa [#allocation4], 0
    // Predicated region
    $region2: #{_forward_impl.2} parent=1 // pred_check
      _
    $region3: #{_forward_impl.2} parent=1 // pred_check_branch
      %14 = sbr.rel (0) target = $region5
    $region4: #{_forward_impl.2} parent=1 // pred_region
      _
    $region5: #{_forward_impl.2} parent=1 // pred_fallthru
      _
    // Predicated region
    $region6: #{_forward_impl.2} parent=1 // pred_check
      _
    $region7: #{_forward_impl.2} parent=1 // pred_check_branch
      %16 = sbr.rel (0) target = $region9
    $region8: #{_forward_impl.2} parent=1 // pred_region
      _
    $region9: #{_forward_impl.2} parent=1 // pred_fallthru
      _
    // Predicated region
    $region10: #{_forward_impl.2} parent=1 // pred_check
      _
    $region11: #{_forward_impl.2} parent=1 // pred_check_branch
      %18 = sbr.rel (0) target = $region13
    $region12: #{_forward_impl.2} parent=1 // pred_region
      _
    $region13: #{_forward_impl.2} parent=1 // pred_fallthru
      _
    // Predicated region
    $region14: #{_forward_impl.2} parent=1 // pred_check
      _
    $region15: #{_forward_impl.2} parent=1 // pred_check_branch
      %20 = sbr.rel (0) target = $region17
    $region16: #{_forward_impl.2} parent=1 // pred_region
      _
    $region17: #{_forward_impl.2} parent=1 // pred_fallthru
      _
    // Predicated region
    $region18: #{_forward_impl.2} parent=1 // pred_check
      _
    $region19: #{_forward_impl.2} parent=1 // pred_check_branch
      %22 = sbr.rel (0) target = $region21
    $region20: #{_forward_impl.2} parent=1 // pred_region
      _
    $region21: #{_forward_impl.2} parent=1 // pred_fallthru
      _
    // Predicated region
    $region22: #{_forward_impl.2} parent=1 // pred_check
      _
    $region23: #{_forward_impl.2} parent=1 // pred_check_branch
      %24 = sbr.rel (0) target = $region25
    $region24: #{_forward_impl.2} parent=1 // pred_region
      %s26 = ssub.s32 1024, 1024
      %27 = vsyncadd [#allocation4], %s26
      %s28 = sshll.u32 [#allocation3], 4
      %s29 = int_to_ptr.vmem [resolvable:$true] %s28
      %34 = dma.hbm_to_vmem [thread:$0]  %s5, 1024, %s29, [#allocation4], 64, 64, 4
    $region25: #{_forward_impl.2} parent=1 // pred_fallthru
      _
    // Predicated region
    $region26: #{_forward_impl.2} parent=1 // pred_check
      _
    $region27: #{_forward_impl.2} parent=1 // pred_check_branch
      %36 = sbr.rel (0) target = $region29
    $region28: #{_forward_impl.2} parent=1 // pred_region
      _
    $region29: #{_forward_impl.2} parent=1 // pred_fallthru
      _
    // Predicated region
    $region30: #{_forward_impl.2} parent=1 // pred_check
      _
    $region31: #{_forward_impl.2} parent=1 // pred_check_branch
      %38 = sbr.rel (0) target = $region33
    $region32: #{_forward_impl.2} parent=1 // pred_region
      %39 = dma.done [#allocation4], 1024
    $region33: #{_forward_impl.2} parent=1 // pred_fallthru
      _
    %p41 = scmp.eq.s32.totalorder 0, 0
    // Predicated region
    $region34: #{_forward_impl.2} parent=1 // pred_check
      %p42 = pneg %p41
    $region35: #{_forward_impl.2} parent=1 // pred_check_branch
      %44 = sbr.rel (%p42) target = $region37
    $region36: #{_forward_impl.2} parent=1 // pred_region
      %45 = vst [vmem:[#allocation2] sm:$0xff] 0.0
      %46 = vst [vmem:[#allocation2 + $0x8] sm:$0xff] 0.0
      %47 = vst [vmem:[#allocation2 + $0x10] sm:$0xff] 0.0
      %48 = vst [vmem:[#allocation2 + $0x18] sm:$0xff] 0.0
      %49 = vst [vmem:[#allocation2 + $0x20] sm:$0xff] 0.0
      %50 = vst [vmem:[#allocation2 + $0x28] sm:$0xff] 0.0
      %51 = vst [vmem:[#allocation2 + $0x30] sm:$0xff] 0.0
      %52 = vst [vmem:[#allocation2 + $0x38] sm:$0xff] 0.0
      %53 = vst [vmem:[#allocation2 + $0x40] sm:$0xff] 0.0
      %54 = vst [vmem:[#allocation2 + $0x48] sm:$0xff] 0.0
      %55 = vst [vmem:[#allocation2 + $0x50] sm:$0xff] 0.0
      %56 = vst [vmem:[#allocation2 + $0x58] sm:$0xff] 0.0
      %57 = vst [vmem:[#allocation2 + $0x60] sm:$0xff] 0.0
      %58 = vst [vmem:[#allocation2 + $0x68] sm:$0xff] 0.0
      %59 = vst [vmem:[#allocation2 + $0x70] sm:$0xff] 0.0
      %60 = vst [vmem:[#allocation2 + $0x78] sm:$0xff] 0.0
    $region37: #{_forward_impl.2} parent=1 // pred_fallthru
      _
    %v61 = vld [vmem:[#allocation2] sm:$0xff]
    %v62 = vld [vmem:[#allocation2 + $0x8] sm:$0xff]
    %v63 = vld [vmem:[#allocation2 + $0x10] sm:$0xff]
    %v64 = vld [vmem:[#allocation2 + $0x18] sm:$0xff]
    %v65 = vld [vmem:[#allocation2 + $0x20] sm:$0xff]
    %v66 = vld [vmem:[#allocation2 + $0x28] sm:$0xff]
    %v67 = vld [vmem:[#allocation2 + $0x30] sm:$0xff]
    %v68 = vld [vmem:[#allocation2 + $0x38] sm:$0xff]
    %v69 = vld [vmem:[#allocation2 + $0x40] sm:$0xff]
    %v70 = vld [vmem:[#allocation2 + $0x48] sm:$0xff]
    %v71 = vld [vmem:[#allocation2 + $0x50] sm:$0xff]
    %v72 = vld [vmem:[#allocation2 + $0x58] sm:$0xff]
    %v73 = vld [vmem:[#allocation2 + $0x60] sm:$0xff]
    %v74 = vld [vmem:[#allocation2 + $0x68] sm:$0xff]
    %v75 = vld [vmem:[#allocation2 + $0x70] sm:$0xff]
    %v76 = vld [vmem:[#allocation2 + $0x78] sm:$0xff]
    %v77 = vld [vmem:[%s0] sm:$0xff]
    %v78 = vld [vmem:[%s0 + $0x8] sm:$0xff]
    %v79 = vld [vmem:[%s0 + $0x10] sm:$0xff]
    %v80 = vld [vmem:[%s0 + $0x18] sm:$0xff]
    %v81 = vunpack.c.l.s8.bf16 %v77
    %v82 = vunpack.c.h.s8.bf16 %v77
    %v83 = vunpack.c.l.s8.bf16 %v78
    %v84 = vunpack.c.h.s8.bf16 %v78
    %v85 = vunpack.c.l.s8.bf16 %v79
    %v86 = vunpack.c.h.s8.bf16 %v79
    %v87 = vunpack.c.l.s8.bf16 %v80
    %v88 = vunpack.c.h.s8.bf16 %v80
    %v89 = vld [vmem:[%s1] sm:$0xf]
    %v90 = vld [vmem:[%s1 + $0x4] sm:$0xf]
    %v91 = vld [vmem:[%s1 + $0x8] sm:$0xf]
    %v92 = vld [vmem:[%s1 + $0xc] sm:$0xf]
    %v93 = vld [vmem:[%s1 + $0x10] sm:$0xf]
    %v94 = vld [vmem:[%s1 + $0x14] sm:$0xf]
    %v95 = vld [vmem:[%s1 + $0x18] sm:$0xf]
    %v96 = vld [vmem:[%s1 + $0x1c] sm:$0xf]
    %v97 = vld [vmem:[%s1 + $0x20] sm:$0xf]
    %v98 = vld [vmem:[%s1 + $0x24] sm:$0xf]
    %v99 = vld [vmem:[%s1 + $0x28] sm:$0xf]
    %v100 = vld [vmem:[%s1 + $0x2c] sm:$0xf]
    %v101 = vld [vmem:[%s1 + $0x30] sm:$0xf]
    %v102 = vld [vmem:[%s1 + $0x34] sm:$0xf]
    %v103 = vld [vmem:[%s1 + $0x38] sm:$0xf]
    %v104 = vld [vmem:[%s1 + $0x3c] sm:$0xf]
    %v121 = vunpack.c.l.b16 %v89
    %v122 = vunpack.c.l.b16 %v90
    %v123 = vunpack.c.l.b16 %v91
    %v124 = vunpack.c.l.b16 %v92
    %v125 = vunpack.c.l.b16 %v93
    %v126 = vunpack.c.l.b16 %v94
    %v127 = vunpack.c.l.b16 %v95
    %v128 = vunpack.c.l.b16 %v96
    %v129 = vunpack.c.l.b16 %v97
    %v130 = vunpack.c.l.b16 %v98
    %v131 = vunpack.c.l.b16 %v99
    %v132 = vunpack.c.l.b16 %v100
    %v133 = vunpack.c.l.b16 %v101
    %v134 = vunpack.c.l.b16 %v102
    %v135 = vunpack.c.l.b16 %v103
    %v136 = vunpack.c.l.b16 %v104
    %v137 = vpack.c.b16 %v122, %v121
    %v138 = vpack.c.b16 %v124, %v123
    %v139 = vpack.c.b16 %v126, %v125
    %v140 = vpack.c.b16 %v128, %v127
    %v141 = vpack.c.b16 %v130, %v129
    %v142 = vpack.c.b16 %v132, %v131
    %v143 = vpack.c.b16 %v134, %v133
    %v144 = vpack.c.b16 %v136, %v135
    %153 = vmatprep.subr.bf16.mxu0 0
    %154 = vmatpush1.bf16.msra.mxu0 %v137
    %155 = vmatprep.subr.bf16.mxu0 0
    %156 = vmatpush1.bf16.msra.mxu0 %v138
    %157 = vmatprep.subr.bf16.mxu0 0
    %158 = vmatpush1.bf16.msra.mxu0 %v139
    %159 = vmatprep.subr.bf16.mxu0 0
    %160 = vmatpush1.bf16.msra.mxu0 %v140
    %161 = vmatprep.subr.bf16.mxu0 0
    %162 = vmatpush1.bf16.msra.mxu0 %v141
    %163 = vmatprep.subr.bf16.mxu0 0
    %164 = vmatpush1.bf16.msra.mxu0 %v142
    %165 = vmatprep.subr.bf16.mxu0 0
    %166 = vmatpush1.bf16.msra.mxu0 %v143
    %167 = vmatprep.subr.bf16.mxu0 0
    %168 = vmatpush1.bf16.msra.mxu0 %v144
    %169 = vmatprep.subr.bf16.mxu0 0
    %170 = vmatpush1.bf16.msra.mxu0 0
    %171 = vmatprep.subr.bf16.mxu0 0
    %172 = vmatpush1.bf16.msra.mxu0 0
    %173 = vmatprep.subr.bf16.mxu0 0
    %174 = vmatpush1.bf16.msra.mxu0 0
    %175 = vmatprep.subr.bf16.mxu0 0
    %176 = vmatpush1.bf16.msra.mxu0 0
    %177 = vmatprep.subr.bf16.mxu0 0
    %178 = vmatpush1.bf16.msra.mxu0 0
    %179 = vmatprep.subr.bf16.mxu0 0
    %180 = vmatpush1.bf16.msra.mxu0 0
    %181 = vmatprep.subr.bf16.mxu0 0
    %182 = vmatpush1.bf16.msra.mxu0 0
    %183 = vmatprep.subr.bf16.mxu0 0
    %184 = vmatpush1.bf16.msra.mxu0 0
    %185 = vmatprep.mubr.bf16.mxu0 0
    %186 = vmatmul.mubr.bf16.gmra.mrb[0].mxu0 %v81
    %v187 = vpop.f32.mrb[0].mxu0
    %v188 = vadd.f32 0.0, %v187
    %v189 = vpop.f32.mrb[0].mxu0
    %v190 = vpop.f32.mrb[0].mxu0
    %v191 = vadd.f32 0.0, %v190
    %v192 = vpop.f32.mrb[0].mxu0
    %193 = vmatprep.mubr.bf16.mxu0 0
    %194 = vmatmul.mubr.bf16.gmra.mrb[0].mxu0 %v82
    %v195 = vpop.f32.mrb[0].mxu0
    %v196 = vadd.f32 0.0, %v195
    %v197 = vpop.f32.mrb[0].mxu0
    %v198 = vpop.f32.mrb[0].mxu0
    %v199 = vadd.f32 0.0, %v198
    %v200 = vpop.f32.mrb[0].mxu0
    %201 = vmatprep.mubr.bf16.mxu0 0
    %202 = vmatmul.mubr.bf16.gmra.mrb[0].mxu0 %v83
    %v203 = vpop.f32.mrb[0].mxu0
    %v204 = vadd.f32 0.0, %v203
    %v205 = vpop.f32.mrb[0].mxu0
    %v206 = vpop.f32.mrb[0].mxu0
    %v207 = vadd.f32 0.0, %v206
    %v208 = vpop.f32.mrb[0].mxu0
    %209 = vmatprep.mubr.bf16.mxu0 0
    %210 = vmatmul.mubr.bf16.gmra.mrb[0].mxu0 %v84
    %v211 = vpop.f32.mrb[0].mxu0
    %v212 = vadd.f32 0.0, %v211
    %v213 = vpop.f32.mrb[0].mxu0
    %v214 = vpop.f32.mrb[0].mxu0
    %v215 = vadd.f32 0.0, %v214
    %v216 = vpop.f32.mrb[0].mxu0
    %217 = vmatprep.mubr.bf16.mxu0 0
    %218 = vmatmul.mubr.bf16.gmra.mrb[0].mxu0 %v85
    %v219 = vpop.f32.mrb[0].mxu0
    %v220 = vadd.f32 0.0, %v219
    %v221 = vpop.f32.mrb[0].mxu0
    %v222 = vpop.f32.mrb[0].mxu0
    %v223 = vadd.f32 0.0, %v222
    %v224 = vpop.f32.mrb[0].mxu0
    %225 = vmatprep.mubr.bf16.mxu0 0
    %226 = vmatmul.mubr.bf16.gmra.mrb[0].mxu0 %v86
    %v227 = vpop.f32.mrb[0].mxu0
    %v228 = vadd.f32 0.0, %v227
    %v229 = vpop.f32.mrb[0].mxu0
    %v230 = vpop.f32.mrb[0].mxu0
    %v231 = vadd.f32 0.0, %v230
    %v232 = vpop.f32.mrb[0].mxu0
    %233 = vmatprep.mubr.bf16.mxu0 0
    %234 = vmatmul.mubr.bf16.gmra.mrb[0].mxu0 %v87
    %v235 = vpop.f32.mrb[0].mxu0
    %v236 = vadd.f32 0.0, %v235
    %v237 = vpop.f32.mrb[0].mxu0
    %v238 = vpop.f32.mrb[0].mxu0
    %v239 = vadd.f32 0.0, %v238
    %v240 = vpop.f32.mrb[0].mxu0
    %241 = vmatprep.mubr.bf16.mxu0 0
    %242 = vmatmul.mubr.bf16.gmra.mrb[0].mxu0 %v88
    %v243 = vpop.f32.mrb[0].mxu0
    %v244 = vadd.f32 0.0, %v243
    %v245 = vpop.f32.mrb[0].mxu0
    %v246 = vpop.f32.mrb[0].mxu0
    %v247 = vadd.f32 0.0, %v246
    %v248 = vpop.f32.mrb[0].mxu0
    %249 = vdwg.mxu0
    %v250 = vadd.f32 %v61, %v188
    %v251 = vadd.f32 %v62, %v191
    %v252 = vadd.f32 %v63, %v196
    %v253 = vadd.f32 %v64, %v199
    %v254 = vadd.f32 %v65, %v204
    %v255 = vadd.f32 %v66, %v207
    %v256 = vadd.f32 %v67, %v212
    %v257 = vadd.f32 %v68, %v215
    %v258 = vadd.f32 %v69, %v220
    %v259 = vadd.f32 %v70, %v223
    %v260 = vadd.f32 %v71, %v228
    %v261 = vadd.f32 %v72, %v231
    %v262 = vadd.f32 %v73, %v236
    %v263 = vadd.f32 %v74, %v239
    %v264 = vadd.f32 %v75, %v244
    %v265 = vadd.f32 %v76, %v247
    %266 = vst [vmem:[#allocation2] sm:$0xff] %v250
    %267 = vst [vmem:[#allocation2 + $0x8] sm:$0xff] %v251
    %268 = vst [vmem:[#allocation2 + $0x10] sm:$0xff] %v252
    %269 = vst [vmem:[#allocation2 + $0x18] sm:$0xff] %v253
    %270 = vst [vmem:[#allocation2 + $0x20] sm:$0xff] %v254
    %271 = vst [vmem:[#allocation2 + $0x28] sm:$0xff] %v255
    %272 = vst [vmem:[#allocation2 + $0x30] sm:$0xff] %v256
    %273 = vst [vmem:[#allocation2 + $0x38] sm:$0xff] %v257
    %274 = vst [vmem:[#allocation2 + $0x40] sm:$0xff] %v258
    %275 = vst [vmem:[#allocation2 + $0x48] sm:$0xff] %v259
    %276 = vst [vmem:[#allocation2 + $0x50] sm:$0xff] %v260
    %277 = vst [vmem:[#allocation2 + $0x58] sm:$0xff] %v261
    %278 = vst [vmem:[#allocation2 + $0x60] sm:$0xff] %v262
    %279 = vst [vmem:[#allocation2 + $0x68] sm:$0xff] %v263
    %280 = vst [vmem:[#allocation2 + $0x70] sm:$0xff] %v264
    %281 = vst [vmem:[#allocation2 + $0x78] sm:$0xff] %v265
    // Predicated region
    $region38: #{_forward_impl.2} parent=1 // pred_check
      %p282 = pneg %p41
    $region39: #{_forward_impl.2} parent=1 // pred_check_branch
      %284 = sbr.rel (%p282) target = $region41
    $region40: #{_forward_impl.2} parent=1 // pred_region
      %v285 = vld [vmem:[#allocation2] sm:$0xff]
      %v286 = vld [vmem:[#allocation2 + $0x8] sm:$0xff]
      %v287 = vld [vmem:[#allocation2 + $0x10] sm:$0xff]
      %v288 = vld [vmem:[#allocation2 + $0x18] sm:$0xff]
      %v289 = vld [vmem:[#allocation2 + $0x20] sm:$0xff]
      %v290 = vld [vmem:[#allocation2 + $0x28] sm:$0xff]
      %v291 = vld [vmem:[#allocation2 + $0x30] sm:$0xff]
      %v292 = vld [vmem:[#allocation2 + $0x38] sm:$0xff]
      %v293 = vld [vmem:[#allocation2 + $0x40] sm:$0xff]
      %v294 = vld [vmem:[#allocation2 + $0x48] sm:$0xff]
      %v295 = vld [vmem:[#allocation2 + $0x50] sm:$0xff]
      %v296 = vld [vmem:[#allocation2 + $0x58] sm:$0xff]
      %v297 = vld [vmem:[#allocation2 + $0x60] sm:$0xff]
      %v298 = vld [vmem:[#allocation2 + $0x68] sm:$0xff]
      %v299 = vld [vmem:[#allocation2 + $0x70] sm:$0xff]
      %v300 = vld [vmem:[#allocation2 + $0x78] sm:$0xff]
      %v301 = vld [vmem:[%s3] sm:$0xff]
      %v302 = vld [vmem:[%s3 + $0x8] sm:$0xff]
      %v303 = vld [vmem:[%s3 + $0x10] sm:$0xff]
      %v304 = vld [vmem:[%s3 + $0x18] sm:$0xff]
      %v305 = vld [vmem:[%s3 + $0x20] sm:$0xff]
      %v306 = vld [vmem:[%s3 + $0x28] sm:$0xff]
      %v307 = vld [vmem:[%s3 + $0x30] sm:$0xff]
      %v308 = vld [vmem:[%s3 + $0x38] sm:$0xff]
      %v309 = vld [vmem:[%s3 + $0x40] sm:$0xff]
      %v310 = vld [vmem:[%s3 + $0x48] sm:$0xff]
      %v311 = vld [vmem:[%s3 + $0x50] sm:$0xff]
      %v312 = vld [vmem:[%s3 + $0x58] sm:$0xff]
      %v313 = vld [vmem:[%s3 + $0x60] sm:$0xff]
      %v314 = vld [vmem:[%s3 + $0x68] sm:$0xff]
      %v315 = vld [vmem:[%s3 + $0x70] sm:$0xff]
      %v316 = vld [vmem:[%s3 + $0x78] sm:$0xff]
      %318 = vset.pattern.permute.xlu0 0
      %319 = vperm.xlu0 %318, %v301
      %v320 = vpop.permute.xlu0 %319
      %323 = vset.pattern.permute.xlu0 0
      %324 = vperm.xlu0 %323, %v302
      %v325 = vpop.permute.xlu0 %324
      %328 = vset.pattern.permute.xlu0 0
      %329 = vperm.xlu0 %328, %v303
      %v330 = vpop.permute.xlu0 %329
      %333 = vset.pattern.permute.xlu0 0
      %334 = vperm.xlu0 %333, %v304
      %v335 = vpop.permute.xlu0 %334
      %338 = vset.pattern.permute.xlu0 0
      %339 = vperm.xlu0 %338, %v305
      %v340 = vpop.permute.xlu0 %339
      %343 = vset.pattern.permute.xlu0 0
      %344 = vperm.xlu0 %343, %v306
      %v345 = vpop.permute.xlu0 %344
      %348 = vset.pattern.permute.xlu0 0
      %349 = vperm.xlu0 %348, %v307
      %v350 = vpop.permute.xlu0 %349
      %353 = vset.pattern.permute.xlu0 0
      %354 = vperm.xlu0 %353, %v308
      %v355 = vpop.permute.xlu0 %354
      %358 = vset.pattern.permute.xlu0 0
      %359 = vperm.xlu0 %358, %v309
      %v360 = vpop.permute.xlu0 %359
      %363 = vset.pattern.permute.xlu0 0
      %364 = vperm.xlu0 %363, %v310
      %v365 = vpop.permute.xlu0 %364
      %368 = vset.pattern.permute.xlu0 0
      %369 = vperm.xlu0 %368, %v311
      %v370 = vpop.permute.xlu0 %369
      %373 = vset.pattern.permute.xlu0 0
      %374 = vperm.xlu0 %373, %v312
      %v375 = vpop.permute.xlu0 %374
      %378 = vset.pattern.permute.xlu0 0
      %379 = vperm.xlu0 %378, %v313
      %v380 = vpop.permute.xlu0 %379
      %383 = vset.pattern.permute.xlu0 0
      %384 = vperm.xlu0 %383, %v314
      %v385 = vpop.permute.xlu0 %384
      %388 = vset.pattern.permute.xlu0 0
      %389 = vperm.xlu0 %388, %v315
      %v390 = vpop.permute.xlu0 %389
      %393 = vset.pattern.permute.xlu0 0
      %394 = vperm.xlu0 %393, %v316
      %v395 = vpop.permute.xlu0 %394
      %v397 = vmul.f32 %v285, %v320
      %v398 = vmul.f32 %v286, %v325
      %v399 = vmul.f32 %v287, %v330
      %v400 = vmul.f32 %v288, %v335
      %v401 = vmul.f32 %v289, %v340
      %v402 = vmul.f32 %v290, %v345
      %v403 = vmul.f32 %v291, %v350
      %v404 = vmul.f32 %v292, %v355
      %v405 = vmul.f32 %v293, %v360
      %v406 = vmul.f32 %v294, %v365
      %v407 = vmul.f32 %v295, %v370
      %v408 = vmul.f32 %v296, %v375
      %v409 = vmul.f32 %v297, %v380
      %v410 = vmul.f32 %v298, %v385
      %v411 = vmul.f32 %v299, %v390
      %v412 = vmul.f32 %v300, %v395
      %v413 = vpack.c.bf16 %v398, %v397
      %v414 = vpack.c.bf16 %v400, %v399
      %v415 = vpack.c.bf16 %v402, %v401
      %v416 = vpack.c.bf16 %v404, %v403
      %v417 = vpack.c.bf16 %v406, %v405
      %v418 = vpack.c.bf16 %v408, %v407
      %v419 = vpack.c.bf16 %v410, %v409
      %v420 = vpack.c.bf16 %v412, %v411
      %v421 = vld [vmem:[%s2] sm:$0xf]
      %v422 = vld [vmem:[%s2 + $0x4] sm:$0xf]
      %v423 = vld [vmem:[%s2 + $0x8] sm:$0xf]
      %v424 = vld [vmem:[%s2 + $0xc] sm:$0xf]
      %v425 = vld [vmem:[%s2 + $0x10] sm:$0xf]
      %v426 = vld [vmem:[%s2 + $0x14] sm:$0xf]
      %v427 = vld [vmem:[%s2 + $0x18] sm:$0xf]
      %v428 = vld [vmem:[%s2 + $0x1c] sm:$0xf]
      %v429 = vld [vmem:[%s2 + $0x20] sm:$0xf]
      %v430 = vld [vmem:[%s2 + $0x24] sm:$0xf]
      %v431 = vld [vmem:[%s2 + $0x28] sm:$0xf]
      %v432 = vld [vmem:[%s2 + $0x2c] sm:$0xf]
      %v433 = vld [vmem:[%s2 + $0x30] sm:$0xf]
      %v434 = vld [vmem:[%s2 + $0x34] sm:$0xf]
      %v435 = vld [vmem:[%s2 + $0x38] sm:$0xf]
      %v436 = vld [vmem:[%s2 + $0x3c] sm:$0xf]
      %v437 = vld [vmem:[%s4] sm:$0xf]
      %v438 = vld [vmem:[%s4 + $0x4] sm:$0xf]
      %v439 = vld [vmem:[%s4 + $0x8] sm:$0xf]
      %v440 = vld [vmem:[%s4 + $0xc] sm:$0xf]
      %v441 = vld [vmem:[%s4 + $0x10] sm:$0xf]
      %v442 = vld [vmem:[%s4 + $0x14] sm:$0xf]
      %v443 = vld [vmem:[%s4 + $0x18] sm:$0xf]
      %v444 = vld [vmem:[%s4 + $0x1c] sm:$0xf]
      %v445 = vld [vmem:[%s4 + $0x20] sm:$0xf]
      %v446 = vld [vmem:[%s4 + $0x24] sm:$0xf]
      %v447 = vld [vmem:[%s4 + $0x28] sm:$0xf]
      %v448 = vld [vmem:[%s4 + $0x2c] sm:$0xf]
      %v449 = vld [vmem:[%s4 + $0x30] sm:$0xf]
      %v450 = vld [vmem:[%s4 + $0x34] sm:$0xf]
      %v451 = vld [vmem:[%s4 + $0x38] sm:$0xf]
      %v452 = vld [vmem:[%s4 + $0x3c] sm:$0xf]
      %v453 = vld [vmem:[#allocation3] sm:$0xf]
      %v454 = vld [vmem:[#allocation3 + $0x4] sm:$0xf]
      %v455 = vld [vmem:[#allocation3 + $0x8] sm:$0xf]
      %v456 = vld [vmem:[#allocation3 + $0xc] sm:$0xf]
      %v457 = vld [vmem:[#allocation3 + $0x10] sm:$0xf]
      %v458 = vld [vmem:[#allocation3 + $0x14] sm:$0xf]
      %v459 = vld [vmem:[#allocation3 + $0x18] sm:$0xf]
      %v460 = vld [vmem:[#allocation3 + $0x1c] sm:$0xf]
      %v461 = vld [vmem:[#allocation3 + $0x20] sm:$0xf]
      %v462 = vld [vmem:[#allocation3 + $0x24] sm:$0xf]
      %v463 = vld [vmem:[#allocation3 + $0x28] sm:$0xf]
      %v464 = vld [vmem:[#allocation3 + $0x2c] sm:$0xf]
      %v465 = vld [vmem:[#allocation3 + $0x30] sm:$0xf]
      %v466 = vld [vmem:[#allocation3 + $0x34] sm:$0xf]
      %v467 = vld [vmem:[#allocation3 + $0x38] sm:$0xf]
      %v468 = vld [vmem:[#allocation3 + $0x3c] sm:$0xf]
      %v485 = vunpack.c.l.b16 %v453
      %v486 = vunpack.c.l.b16 %v454
      %v487 = vunpack.c.l.b16 %v455
      %v488 = vunpack.c.l.b16 %v456
      %v489 = vunpack.c.l.b16 %v457
      %v490 = vunpack.c.l.b16 %v458
      %v491 = vunpack.c.l.b16 %v459
      %v492 = vunpack.c.l.b16 %v460
      %v493 = vunpack.c.l.b16 %v461
      %v494 = vunpack.c.l.b16 %v462
      %v495 = vunpack.c.l.b16 %v463
      %v496 = vunpack.c.l.b16 %v464
      %v497 = vunpack.c.l.b16 %v465
      %v498 = vunpack.c.l.b16 %v466
      %v499 = vunpack.c.l.b16 %v467
      %v500 = vunpack.c.l.b16 %v468
      %v501 = vpack.c.b16 %v486, %v485
      %v502 = vpack.c.b16 %v488, %v487
      %v503 = vpack.c.b16 %v490, %v489
      %v504 = vpack.c.b16 %v492, %v491
      %v505 = vpack.c.b16 %v494, %v493
      %v506 = vpack.c.b16 %v496, %v495
      %v507 = vpack.c.b16 %v498, %v497
      %v508 = vpack.c.b16 %v500, %v499
      %517 = vmatprep.subr.bf16.mxu0 0
      %518 = vmatpush1.bf16.msra.mxu0 %v501
      %519 = vmatprep.subr.bf16.mxu0 0
      %520 = vmatpush1.bf16.msra.mxu0 %v502
      %521 = vmatprep.subr.bf16.mxu0 0
      %522 = vmatpush1.bf16.msra.mxu0 %v503
      %523 = vmatprep.subr.bf16.mxu0 0
      %524 = vmatpush1.bf16.msra.mxu0 %v504
      %525 = vmatprep.subr.bf16.mxu0 0
      %526 = vmatpush1.bf16.msra.mxu0 %v505
      %527 = vmatprep.subr.bf16.mxu0 0
      %528 = vmatpush1.bf16.msra.mxu0 %v506
      %529 = vmatprep.subr.bf16.mxu0 0
      %530 = vmatpush1.bf16.msra.mxu0 %v507
      %531 = vmatprep.subr.bf16.mxu0 0
      %532 = vmatpush1.bf16.msra.mxu0 %v508
      %533 = vmatprep.subr.bf16.mxu0 0
      %534 = vmatpush1.bf16.msra.mxu0 0
      %535 = vmatprep.subr.bf16.mxu0 0
      %536 = vmatpush1.bf16.msra.mxu0 0
      %537 = vmatprep.subr.bf16.mxu0 0
      %538 = vmatpush1.bf16.msra.mxu0 0
      %539 = vmatprep.subr.bf16.mxu0 0
      %540 = vmatpush1.bf16.msra.mxu0 0
      %541 = vmatprep.subr.bf16.mxu0 0
      %542 = vmatpush1.bf16.msra.mxu0 0
      %543 = vmatprep.subr.bf16.mxu0 0
      %544 = vmatpush1.bf16.msra.mxu0 0
      %545 = vmatprep.subr.bf16.mxu0 0
      %546 = vmatpush1.bf16.msra.mxu0 0
      %547 = vmatprep.subr.bf16.mxu0 0
      %548 = vmatpush1.bf16.msra.mxu0 0
      %549 = vmatprep.mubr.bf16.mxu0 0
      %550 = vmatmul.mubr.bf16.gmra.mrb[0].mxu0 %v413
      %v551 = vpop.f32.mrb[0].mxu0
      %v552 = vadd.f32 0.0, %v551
      %v553 = vpop.f32.mrb[0].mxu0
      %v554 = vpop.f32.mrb[0].mxu0
      %v555 = vadd.f32 0.0, %v554
      %v556 = vpop.f32.mrb[0].mxu0
      %557 = vmatprep.mubr.bf16.mxu0 0
      %558 = vmatmul.mubr.bf16.gmra.mrb[0].mxu0 %v414
      %v559 = vpop.f32.mrb[0].mxu0
      %v560 = vadd.f32 0.0, %v559
      %v561 = vpop.f32.mrb[0].mxu0
      %v562 = vpop.f32.mrb[0].mxu0
      %v563 = vadd.f32 0.0, %v562
      %v564 = vpop.f32.mrb[0].mxu0
      %565 = vmatprep.mubr.bf16.mxu0 0
      %566 = vmatmul.mubr.bf16.gmra.mrb[0].mxu0 %v415
      %v567 = vpop.f32.mrb[0].mxu0
      %v568 = vadd.f32 0.0, %v567
      %v569 = vpop.f32.mrb[0].mxu0
      %v570 = vpop.f32.mrb[0].mxu0
      %v571 = vadd.f32 0.0, %v570
      %v572 = vpop.f32.mrb[0].mxu0
      %573 = vmatprep.mubr.bf16.mxu0 0
      %574 = vmatmul.mubr.bf16.gmra.mrb[0].mxu0 %v416
      %v575 = vpop.f32.mrb[0].mxu0
      %v576 = vadd.f32 0.0, %v575
      %v577 = vpop.f32.mrb[0].mxu0
      %v578 = vpop.f32.mrb[0].mxu0
      %v579 = vadd.f32 0.0, %v578
      %v580 = vpop.f32.mrb[0].mxu0
      %581 = vmatprep.mubr.bf16.mxu0 0
      %582 = vmatmul.mubr.bf16.gmra.mrb[0].mxu0 %v417
      %v583 = vpop.f32.mrb[0].mxu0
      %v584 = vadd.f32 0.0, %v583
      %v585 = vpop.f32.mrb[0].mxu0
      %v586 = vpop.f32.mrb[0].mxu0
      %v587 = vadd.f32 0.0, %v586
      %v588 = vpop.f32.mrb[0].mxu0
      %589 = vmatprep.mubr.bf16.mxu0 0
      %590 = vmatmul.mubr.bf16.gmra.mrb[0].mxu0 %v418
      %v591 = vpop.f32.mrb[0].mxu0
      %v592 = vadd.f32 0.0, %v591
      %v593 = vpop.f32.mrb[0].mxu0
      %v594 = vpop.f32.mrb[0].mxu0
      %v595 = vadd.f32 0.0, %v594
      %v596 = vpop.f32.mrb[0].mxu0
      %597 = vmatprep.mubr.bf16.mxu0 0
      %598 = vmatmul.mubr.bf16.gmra.mrb[0].mxu0 %v419
      %v599 = vpop.f32.mrb[0].mxu0
      %v600 = vadd.f32 0.0, %v599
      %v601 = vpop.f32.mrb[0].mxu0
      %v602 = vpop.f32.mrb[0].mxu0
      %v603 = vadd.f32 0.0, %v602
      %v604 = vpop.f32.mrb[0].mxu0
      %605 = vmatprep.mubr.bf16.mxu0 0
      %606 = vmatmul.mubr.bf16.gmra.mrb[0].mxu0 %v420
      %v607 = vpop.f32.mrb[0].mxu0
      %v608 = vadd.f32 0.0, %v607
      %v609 = vpop.f32.mrb[0].mxu0
      %v610 = vpop.f32.mrb[0].mxu0
      %v611 = vadd.f32 0.0, %v610
      %v612 = vpop.f32.mrb[0].mxu0
      %613 = vdwg.mxu0
      %v630 = vunpack.c.l.b16 %v421
      %v631 = vunpack.c.l.b16 %v422
      %v632 = vunpack.c.l.b16 %v423
      %v633 = vunpack.c.l.b16 %v424
      %v634 = vunpack.c.l.b16 %v425
      %v635 = vunpack.c.l.b16 %v426
      %v636 = vunpack.c.l.b16 %v427
      %v637 = vunpack.c.l.b16 %v428
      %v638 = vunpack.c.l.b16 %v429
      %v639 = vunpack.c.l.b16 %v430
      %v640 = vunpack.c.l.b16 %v431
      %v641 = vunpack.c.l.b16 %v432
      %v642 = vunpack.c.l.b16 %v433
      %v643 = vunpack.c.l.b16 %v434
      %v644 = vunpack.c.l.b16 %v435
      %v645 = vunpack.c.l.b16 %v436
      %v646 = vpack.c.b16 %v631, %v630
      %v647 = vpack.c.b16 %v633, %v632
      %v648 = vpack.c.b16 %v635, %v634
      %v649 = vpack.c.b16 %v637, %v636
      %v650 = vpack.c.b16 %v639, %v638
      %v651 = vpack.c.b16 %v641, %v640
      %v652 = vpack.c.b16 %v643, %v642
      %v653 = vpack.c.b16 %v645, %v644
      %v678 = vunpack.c.l.b16 %v437
      %v679 = vunpack.c.l.b16 %v438
      %v680 = vunpack.c.l.b16 %v439
      %v681 = vunpack.c.l.b16 %v440
      %v682 = vunpack.c.l.b16 %v441
      %v683 = vunpack.c.l.b16 %v442
      %v684 = vunpack.c.l.b16 %v443
      %v685 = vunpack.c.l.b16 %v444
      %v686 = vunpack.c.l.b16 %v445
      %v687 = vunpack.c.l.b16 %v446
      %v688 = vunpack.c.l.b16 %v447
      %v689 = vunpack.c.l.b16 %v448
      %v690 = vunpack.c.l.b16 %v449
      %v691 = vunpack.c.l.b16 %v450
      %v692 = vunpack.c.l.b16 %v451
      %v693 = vunpack.c.l.b16 %v452
      %v694 = vpack.c.b16 %v679, %v678
      %v695 = vpack.c.b16 %v681, %v680
      %v696 = vpack.c.b16 %v683, %v682
      %v697 = vpack.c.b16 %v685, %v684
      %v698 = vpack.c.b16 %v687, %v686
      %v699 = vpack.c.b16 %v689, %v688
      %v700 = vpack.c.b16 %v691, %v690
      %v701 = vpack.c.b16 %v693, %v692
      %710 = vmatprep.subr.bf16.mxu0 0
      %711 = vmatpush1.bf16.msra.mxu0 %v694
      %712 = vmatprep.subr.bf16.mxu0 0
      %713 = vmatpush1.bf16.msra.mxu0 %v695
      %714 = vmatprep.subr.bf16.mxu0 0
      %715 = vmatpush1.bf16.msra.mxu0 %v696
      %716 = vmatprep.subr.bf16.mxu0 0
      %717 = vmatpush1.bf16.msra.mxu0 %v697
      %718 = vmatprep.subr.bf16.mxu0 0
      %719 = vmatpush1.bf16.msra.mxu0 %v698
      %720 = vmatprep.subr.bf16.mxu0 0
      %721 = vmatpush1.bf16.msra.mxu0 %v699
      %722 = vmatprep.subr.bf16.mxu0 0
      %723 = vmatpush1.bf16.msra.mxu0 %v700
      %724 = vmatprep.subr.bf16.mxu0 0
      %725 = vmatpush1.bf16.msra.mxu0 %v701
      %726 = vmatprep.subr.bf16.mxu0 0
      %727 = vmatpush1.bf16.msra.mxu0 0
      %728 = vmatprep.subr.bf16.mxu0 0
      %729 = vmatpush1.bf16.msra.mxu0 0
      %730 = vmatprep.subr.bf16.mxu0 0
      %731 = vmatpush1.bf16.msra.mxu0 0
      %732 = vmatprep.subr.bf16.mxu0 0
      %733 = vmatpush1.bf16.msra.mxu0 0
      %734 = vmatprep.subr.bf16.mxu0 0
      %735 = vmatpush1.bf16.msra.mxu0 0
      %736 = vmatprep.subr.bf16.mxu0 0
      %737 = vmatpush1.bf16.msra.mxu0 0
      %738 = vmatprep.subr.bf16.mxu0 0
      %739 = vmatpush1.bf16.msra.mxu0 0
      %740 = vmatprep.subr.bf16.mxu0 0
      %741 = vmatpush1.bf16.msra.mxu0 0
      %742 = vmatprep.mubr.bf16.mxu0 0
      %743 = vmatmul.mubr.bf16.gmra.mrb[0].mxu0 %v646
      %v744 = vpop.f32.mrb[0].mxu0
      %v745 = vadd.f32 %v552, %v744
      %v746 = vpop.f32.mrb[0].mxu0
      %v747 = vpop.f32.mrb[0].mxu0
      %v748 = vadd.f32 %v555, %v747
      %v749 = vpop.f32.mrb[0].mxu0
      %750 = vmatprep.mubr.bf16.mxu0 0
      %751 = vmatmul.mubr.bf16.gmra.mrb[0].mxu0 %v647
      %v752 = vpop.f32.mrb[0].mxu0
      %v753 = vadd.f32 %v560, %v752
      %v754 = vpop.f32.mrb[0].mxu0
      %v755 = vpop.f32.mrb[0].mxu0
      %v756 = vadd.f32 %v563, %v755
      %v757 = vpop.f32.mrb[0].mxu0
      %758 = vmatprep.mubr.bf16.mxu0 0
      %759 = vmatmul.mubr.bf16.gmra.mrb[0].mxu0 %v648
      %v760 = vpop.f32.mrb[0].mxu0
      %v761 = vadd.f32 %v568, %v760
      %v762 = vpop.f32.mrb[0].mxu0
      %v763 = vpop.f32.mrb[0].mxu0
      %v764 = vadd.f32 %v571, %v763
      %v765 = vpop.f32.mrb[0].mxu0
      %766 = vmatprep.mubr.bf16.mxu0 0
      %767 = vmatmul.mubr.bf16.gmra.mrb[0].mxu0 %v649
      %v768 = vpop.f32.mrb[0].mxu0
      %v769 = vadd.f32 %v576, %v768
      %v770 = vpop.f32.mrb[0].mxu0
      %v771 = vpop.f32.mrb[0].mxu0
      %v772 = vadd.f32 %v579, %v771
      %v773 = vpop.f32.mrb[0].mxu0
      %774 = vmatprep.mubr.bf16.mxu0 0
      %775 = vmatmul.mubr.bf16.gmra.mrb[0].mxu0 %v650
      %v776 = vpop.f32.mrb[0].mxu0
      %v777 = vadd.f32 %v584, %v776
      %v778 = vpop.f32.mrb[0].mxu0
      %v779 = vpop.f32.mrb[0].mxu0
      %v780 = vadd.f32 %v587, %v779
      %v781 = vpop.f32.mrb[0].mxu0
      %782 = vmatprep.mubr.bf16.mxu0 0
      %783 = vmatmul.mubr.bf16.gmra.mrb[0].mxu0 %v651
      %v784 = vpop.f32.mrb[0].mxu0
      %v785 = vadd.f32 %v592, %v784
      %v786 = vpop.f32.mrb[0].mxu0
      %v787 = vpop.f32.mrb[0].mxu0
      %v788 = vadd.f32 %v595, %v787
      %v789 = vpop.f32.mrb[0].mxu0
      %790 = vmatprep.mubr.bf16.mxu0 0
      %791 = vmatmul.mubr.bf16.gmra.mrb[0].mxu0 %v652
      %v792 = vpop.f32.mrb[0].mxu0
      %v793 = vadd.f32 %v600, %v792
      %v794 = vpop.f32.mrb[0].mxu0
      %v795 = vpop.f32.mrb[0].mxu0
      %v796 = vadd.f32 %v603, %v795
      %v797 = vpop.f32.mrb[0].mxu0
      %798 = vmatprep.mubr.bf16.mxu0 0
      %799 = vmatmul.mubr.bf16.gmra.mrb[0].mxu0 %v653
      %v800 = vpop.f32.mrb[0].mxu0
      %v801 = vadd.f32 %v608, %v800
      %v802 = vpop.f32.mrb[0].mxu0
      %v803 = vpop.f32.mrb[0].mxu0
      %v804 = vadd.f32 %v611, %v803
      %v805 = vpop.f32.mrb[0].mxu0
      %806 = vdwg.mxu0
      %v807 = vld [vmem:[%s6] sm:$0x1]
      %v809 = vlaneseq
      %v810 = vshrl.u32 %v809, 7
      %v811 = vsub.s32 0, %v810
      %v812 = vrot.slane %v807, %v811
      %v814 = vadd.f32 %v745, %v812
      %v815 = vadd.f32 %v748, %v812
      %v816 = vadd.f32 %v753, %v812
      %v817 = vadd.f32 %v756, %v812
      %v818 = vadd.f32 %v761, %v812
      %v819 = vadd.f32 %v764, %v812
      %v820 = vadd.f32 %v769, %v812
      %v821 = vadd.f32 %v772, %v812
      %v822 = vadd.f32 %v777, %v812
      %v823 = vadd.f32 %v780, %v812
      %v824 = vadd.f32 %v785, %v812
      %v825 = vadd.f32 %v788, %v812
      %v826 = vadd.f32 %v793, %v812
      %v827 = vadd.f32 %v796, %v812
      %v828 = vadd.f32 %v801, %v812
      %v829 = vadd.f32 %v804, %v812
      %v830 = vmax.f32 %v814, 0.0
      %v831 = vmax.f32 %v815, 0.0
      %v832 = vmax.f32 %v816, 0.0
      %v833 = vmax.f32 %v817, 0.0
      %v834 = vmax.f32 %v818, 0.0
      %v835 = vmax.f32 %v819, 0.0
      %v836 = vmax.f32 %v820, 0.0
      %v837 = vmax.f32 %v821, 0.0
      %v838 = vmax.f32 %v822, 0.0
      %v839 = vmax.f32 %v823, 0.0
      %v840 = vmax.f32 %v824, 0.0
      %v841 = vmax.f32 %v825, 0.0
      %v842 = vmax.f32 %v826, 0.0
      %v843 = vmax.f32 %v827, 0.0
      %v844 = vmax.f32 %v828, 0.0
      %v845 = vmax.f32 %v829, 0.0
      %v846 = vpack.c.bf16 %v831, %v830
      %v847 = vpack.c.bf16 %v833, %v832
      %v848 = vpack.c.bf16 %v835, %v834
      %v849 = vpack.c.bf16 %v837, %v836
      %v850 = vpack.c.bf16 %v839, %v838
      %v851 = vpack.c.bf16 %v841, %v840
      %v852 = vpack.c.bf16 %v843, %v842
      %v853 = vpack.c.bf16 %v845, %v844
      %v862 = vunpack.c.l.b16 %v846
      %v863 = vunpack.c.h.b16 %v846
      %v864 = vunpack.c.l.b16 %v847
      %v865 = vunpack.c.h.b16 %v847
      %v866 = vunpack.c.l.b16 %v848
      %v867 = vunpack.c.h.b16 %v848
      %v868 = vunpack.c.l.b16 %v849
      %v869 = vunpack.c.h.b16 %v849
      %v870 = vunpack.c.l.b16 %v850
      %v871 = vunpack.c.h.b16 %v850
      %v872 = vunpack.c.l.b16 %v851
      %v873 = vunpack.c.h.b16 %v851
      %v874 = vunpack.c.l.b16 %v852
      %v875 = vunpack.c.h.b16 %v852
      %v876 = vunpack.c.l.b16 %v853
      %v877 = vunpack.c.h.b16 %v853
      %v878 = vpack.c.b16 %v862, %v862
      %v879 = vpack.c.b16 %v863, %v863
      %v880 = vpack.c.b16 %v864, %v864
      %v881 = vpack.c.b16 %v865, %v865
      %v882 = vpack.c.b16 %v866, %v866
      %v883 = vpack.c.b16 %v867, %v867
      %v884 = vpack.c.b16 %v868, %v868
      %v885 = vpack.c.b16 %v869, %v869
      %v886 = vpack.c.b16 %v870, %v870
      %v887 = vpack.c.b16 %v871, %v871
      %v888 = vpack.c.b16 %v872, %v872
      %v889 = vpack.c.b16 %v873, %v873
      %v890 = vpack.c.b16 %v874, %v874
      %v891 = vpack.c.b16 %v875, %v875
      %v892 = vpack.c.b16 %v876, %v876
      %v893 = vpack.c.b16 %v877, %v877
      %910 = vst [vmem:[%s7] sm:$0xf] %v878
      %911 = vst [vmem:[%s7 + $0x4] sm:$0xf] %v879
      %912 = vst [vmem:[%s7 + $0x8] sm:$0xf] %v880
      %913 = vst [vmem:[%s7 + $0xc] sm:$0xf] %v881
      %914 = vst [vmem:[%s7 + $0x10] sm:$0xf] %v882
      %915 = vst [vmem:[%s7 + $0x14] sm:$0xf] %v883
      %916 = vst [vmem:[%s7 + $0x18] sm:$0xf] %v884
      %917 = vst [vmem:[%s7 + $0x1c] sm:$0xf] %v885
      %918 = vst [vmem:[%s7 + $0x20] sm:$0xf] %v886
      %919 = vst [vmem:[%s7 + $0x24] sm:$0xf] %v887
      %920 = vst [vmem:[%s7 + $0x28] sm:$0xf] %v888
      %921 = vst [vmem:[%s7 + $0x2c] sm:$0xf] %v889
      %922 = vst [vmem:[%s7 + $0x30] sm:$0xf] %v890
      %923 = vst [vmem:[%s7 + $0x34] sm:$0xf] %v891
      %924 = vst [vmem:[%s7 + $0x38] sm:$0xf] %v892
      %925 = vst [vmem:[%s7 + $0x3c] sm:$0xf] %v893
    $region41: #{_forward_impl.2} parent=1 // pred_fallthru
      _
    // Predicated region
    $region42: #{_forward_impl.2} parent=1 // pred_check
      _
    $region43: #{_forward_impl.2} parent=1 // pred_check_branch
      %927 = sbr.rel (0) target = $region45
    $region44: #{_forward_impl.2} parent=1 // pred_region
      _
    $region45: #{_forward_impl.2} parent=1 // pred_fallthru
      _
    // Predicated region
    $region46: #{_forward_impl.2} parent=1 // pred_check
      _
    $region47: #{_forward_impl.2} parent=1 // pred_check_branch
      %929 = sbr.rel (0) target = $region49
    $region48: #{_forward_impl.2} parent=1 // pred_region
      _
    $region49: #{_forward_impl.2} parent=1 // pred_fallthru
      _
    %930 = vsyncpa [#allocation4], 1

// kernel: _forward_impl.3
$region0: #{_forward_impl.3}
  #allocation0 [shape = 'u32[]', space=smem, size = 0x4, offset = 0x4, fixed_abs, tag = 'smem constant byte address 0x4 - core index']
  #allocation1 [shape = 'u32[144,128]{1,0:T(1,128)}', space=vmem, size = 0x12000, scoped, tag = 'internal scratch']
  #allocation2 [shape = 'f32[128,128]{1,0:T(8,128)}', space=vmem, size = 0x10000, scoped, tag = 'scratch operand']
  %s0 = inlined_call_operand.vmem [shape: s8[128,128], index: 0, kind: input, shape index: {}]
  %s1 = inlined_call_operand.vmem [shape: bf16[128,128], index: 1, kind: input, shape index: {}, may-alias: {1,2}]
  %s2 = inlined_call_operand.vmem [shape: bf16[128,128], index: 2, kind: input, shape index: {}, may-alias: {1,2}]
  %s3 = inlined_call_operand.vmem [shape: f32[128,1], index: 3, kind: input, shape index: {}]
  %s4 = inlined_call_operand.vmem [shape: bf16[128,128], index: 4, kind: input, shape index: {}]
  %s5 = inlined_call_operand.vmem [shape: bf16[128,128], index: 5, kind: input, shape index: {}]
  %s6 = inlined_call_operand.vmem [shape: f32[1,128], index: 6, kind: input, shape index: {}]
  %s7 = inlined_call_operand.vmem [shape: bf16[128,128], index: 7, kind: input, shape index: {}]
  %s8 = inlined_call_operand.vmem [shape: f32[1,128], index: 8, kind: input, shape index: {}]
  %s9 = inlined_call_operand.vmem [shape: bf16[128,128], index: 9, kind: input, shape index: {}]
  %s10 = inlined_call_operand.vmem [shape: f32[1,128], index: 10, kind: input, shape index: {}]
  %s11 = inlined_call_operand.vmem [shape: bf16[128,128], index: 11, kind: input, shape index: {}]
  %s12 = inlined_call_operand.vmem [shape: f32[1,128], index: 12, kind: input, shape index: {}]
  %s13 = inlined_call_operand.hbm [shape: f32[128,128], index: 13, kind: output, shape index: {}]
  %s14 = sld [smem:[#allocation0]]
  $region70: #{_forward_impl.3} parent=0
    _
  %s16 = ssub.s32 1, %s14
  %s17 = scalar_select 0, %s16, %s14
  $region1: #{_forward_impl.3} parent=0
    #allocation3 [shape = 'u8[65536]{0}', space=vmem, size = 0x10000, scoped, tag = 'output window, operand 0, single buffered']
    #allocation4 [shape = 's32[1]{0}', space=sflag, size = 0x4, scoped, tag = 'scoped memory for _forward_impl.3']
    %18 = vsyncpa [#allocation4], 0
    // Predicated region
    $region2: #{_forward_impl.3} parent=1 // pred_check
      _
    $region3: #{_forward_impl.3} parent=1 // pred_check_branch
      %20 = sbr.rel (0) target = $region5
    $region4: #{_forward_impl.3} parent=1 // pred_region
      _
    $region5: #{_forward_impl.3} parent=1 // pred_fallthru
      _
    // Predicated region
    $region6: #{_forward_impl.3} parent=1 // pred_check
      _
    $region7: #{_forward_impl.3} parent=1 // pred_check_branch
      %22 = sbr.rel (0) target = $region9
    $region8: #{_forward_impl.3} parent=1 // pred_region
      _
    $region9: #{_forward_impl.3} parent=1 // pred_fallthru
      _
    // Predicated region
    $region10: #{_forward_impl.3} parent=1 // pred_check
      _
    $region11: #{_forward_impl.3} parent=1 // pred_check_branch
      %24 = sbr.rel (0) target = $region13
    $region12: #{_forward_impl.3} parent=1 // pred_region
      _
    $region13: #{_forward_impl.3} parent=1 // pred_fallthru
      _
    // Predicated region
    $region14: #{_forward_impl.3} parent=1 // pred_check
      _
    $region15: #{_forward_impl.3} parent=1 // pred_check_branch
      %26 = sbr.rel (0) target = $region17
    $region16: #{_forward_impl.3} parent=1 // pred_region
      _
    $region17: #{_forward_impl.3} parent=1 // pred_fallthru
      _
    // Predicated region
    $region18: #{_forward_impl.3} parent=1 // pred_check
      _
    $region19: #{_forward_impl.3} parent=1 // pred_check_branch
      %28 = sbr.rel (0) target = $region21
    $region20: #{_forward_impl.3} parent=1 // pred_region
      _
    $region21: #{_forward_impl.3} parent=1 // pred_fallthru
      _
    // Predicated region
    $region22: #{_forward_impl.3} parent=1 // pred_check
      _
    $region23: #{_forward_impl.3} parent=1 // pred_check_branch
      %30 = sbr.rel (0) target = $region25
    $region24: #{_forward_impl.3} parent=1 // pred_region
      _
    $region25: #{_forward_impl.3} parent=1 // pred_fallthru
      _
    // Predicated region
    $region26: #{_forward_impl.3} parent=1 // pred_check
      _
    $region27: #{_forward_impl.3} parent=1 // pred_check_branch
      %32 = sbr.rel (0) target = $region29
    $region28: #{_forward_impl.3} parent=1 // pred_region
      _
    $region29: #{_forward_impl.3} parent=1 // pred_fallthru
      _
    // Predicated region
    $region30: #{_forward_impl.3} parent=1 // pred_check
      _
    $region31: #{_forward_impl.3} parent=1 // pred_check_branch
      %34 = sbr.rel (0) target = $region33
    $region32: #{_forward_impl.3} parent=1 // pred_region
      _
    $region33: #{_forward_impl.3} parent=1 // pred_fallthru
      _
    // Predicated region
    $region34: #{_forward_impl.3} parent=1 // pred_check
      _
    $region35: #{_forward_impl.3} parent=1 // pred_check_branch
      %36 = sbr.rel (0) target = $region37
    $region36: #{_forward_impl.3} parent=1 // pred_region
      _
    $region37: #{_forward_impl.3} parent=1 // pred_fallthru
      _
    // Predicated region
    $region38: #{_forward_impl.3} parent=1 // pred_check
      _
    $region39: #{_forward_impl.3} parent=1 // pred_check_branch
      %38 = sbr.rel (0) target = $region41
    $region40: #{_forward_impl.3} parent=1 // pred_region
      _
    $region41: #{_forward_impl.3} parent=1 // pred_fallthru
      _
    // Predicated region
    $region42: #{_forward_impl.3} parent=1 // pred_check
      _
    $region43: #{_forward_impl.3} parent=1 // pred_check_branch
      %40 = sbr.rel (0) target = $region45
    $region44: #{_forward_impl.3} parent=1 // pred_region
      _
    $region45: #{_forward_impl.3} parent=1 // pred_fallthru
      _
    // Predicated region
    $region46: #{_forward_impl.3} parent=1 // pred_check
      _
    $region47: #{_forward_impl.3} parent=1 // pred_check_branch
      %42 = sbr.rel (0) target = $region49
    $region48: #{_forward_impl.3} parent=1 // pred_region
      _
    $region49: #{_forward_impl.3} parent=1 // pred_fallthru
      _
    // Predicated region
    $region50: #{_forward_impl.3} parent=1 // pred_check
      _
    $region51: #{_forward_impl.3} parent=1 // pred_check_branch
      %44 = sbr.rel (0) target = $region53
    $region52: #{_forward_impl.3} parent=1 // pred_region
      _
    $region53: #{_forward_impl.3} parent=1 // pred_fallthru
      _
    %p46 = scmp.eq.s32.totalorder 0, 0
    // Predicated region
    $region54: #{_forward_impl.3} parent=1 // pred_check
      %p47 = pneg %p46
    $region55: #{_forward_impl.3} parent=1 // pred_check_branch
      %49 = sbr.rel (%p47) target = $region57
    $region56: #{_forward_impl.3} parent=1 // pred_region
      %50 = vst [vmem:[#allocation2] sm:$0xff] 0.0
      %51 = vst [vmem:[#allocation2 + $0x8] sm:$0xff] 0.0
      %52 = vst [vmem:[#allocation2 + $0x10] sm:$0xff] 0.0
      %53 = vst [vmem:[#allocation2 + $0x18] sm:$0xff] 0.0
      %54 = vst [vmem:[#allocation2 + $0x20] sm:$0xff] 0.0
      %55 = vst [vmem:[#allocation2 + $0x28] sm:$0xff] 0.0
      %56 = vst [vmem:[#allocation2 + $0x30] sm:$0xff] 0.0
      %57 = vst [vmem:[#allocation2 + $0x38] sm:$0xff] 0.0
      %58 = vst [vmem:[#allocation2 + $0x40] sm:$0xff] 0.0
      %59 = vst [vmem:[#allocation2 + $0x48] sm:$0xff] 0.0
      %60 = vst [vmem:[#allocation2 + $0x50] sm:$0xff] 0.0
      %61 = vst [vmem:[#allocation2 + $0x58] sm:$0xff] 0.0
      %62 = vst [vmem:[#allocation2 + $0x60] sm:$0xff] 0.0
      %63 = vst [vmem:[#allocation2 + $0x68] sm:$0xff] 0.0
      %64 = vst [vmem:[#allocation2 + $0x70] sm:$0xff] 0.0
      %65 = vst [vmem:[#allocation2 + $0x78] sm:$0xff] 0.0
    $region57: #{_forward_impl.3} parent=1 // pred_fallthru
      _
    %v66 = vld [vmem:[#allocation2] sm:$0xff]
    %v67 = vld [vmem:[#allocation2 + $0x8] sm:$0xff]
    %v68 = vld [vmem:[#allocation2 + $0x10] sm:$0xff]
    %v69 = vld [vmem:[#allocation2 + $0x18] sm:$0xff]
    %v70 = vld [vmem:[#allocation2 + $0x20] sm:$0xff]
    %v71 = vld [vmem:[#allocation2 + $0x28] sm:$0xff]
    %v72 = vld [vmem:[#allocation2 + $0x30] sm:$0xff]
    %v73 = vld [vmem:[#allocation2 + $0x38] sm:$0xff]
    %v74 = vld [vmem:[#allocation2 + $0x40] sm:$0xff]
    %v75 = vld [vmem:[#allocation2 + $0x48] sm:$0xff]
    %v76 = vld [vmem:[#allocation2 + $0x50] sm:$0xff]
    %v77 = vld [vmem:[#allocation2 + $0x58] sm:$0xff]
    %v78 = vld [vmem:[#allocation2 + $0x60] sm:$0xff]
    %v79 = vld [vmem:[#allocation2 + $0x68] sm:$0xff]
    %v80 = vld [vmem:[#allocation2 + $0x70] sm:$0xff]
    %v81 = vld [vmem:[#allocation2 + $0x78] sm:$0xff]
    %v82 = vld [vmem:[%s0] sm:$0xff]
    %v83 = vld [vmem:[%s0 + $0x8] sm:$0xff]
    %v84 = vld [vmem:[%s0 + $0x10] sm:$0xff]
    %v85 = vld [vmem:[%s0 + $0x18] sm:$0xff]
    %v86 = vunpack.c.l.s8.bf16 %v82
    %v87 = vunpack.c.h.s8.bf16 %v82
    %v88 = vunpack.c.l.s8.bf16 %v83
    %v89 = vunpack.c.h.s8.bf16 %v83
    %v90 = vunpack.c.l.s8.bf16 %v84
    %v91 = vunpack.c.h.s8.bf16 %v84
    %v92 = vunpack.c.l.s8.bf16 %v85
    %v93 = vunpack.c.h.s8.bf16 %v85
    %v94 = vld [vmem:[%s1] sm:$0xf]
    %v95 = vld [vmem:[%s1 + $0x4] sm:$0xf]
    %v96 = vld [vmem:[%s1 + $0x8] sm:$0xf]
    %v97 = vld [vmem:[%s1 + $0xc] sm:$0xf]
    %v98 = vld [vmem:[%s1 + $0x10] sm:$0xf]
    %v99 = vld [vmem:[%s1 + $0x14] sm:$0xf]
    %v100 = vld [vmem:[%s1 + $0x18] sm:$0xf]
    %v101 = vld [vmem:[%s1 + $0x1c] sm:$0xf]
    %v102 = vld [vmem:[%s1 + $0x20] sm:$0xf]
    %v103 = vld [vmem:[%s1 + $0x24] sm:$0xf]
    %v104 = vld [vmem:[%s1 + $0x28] sm:$0xf]
    %v105 = vld [vmem:[%s1 + $0x2c] sm:$0xf]
    %v106 = vld [vmem:[%s1 + $0x30] sm:$0xf]
    %v107 = vld [vmem:[%s1 + $0x34] sm:$0xf]
    %v108 = vld [vmem:[%s1 + $0x38] sm:$0xf]
    %v109 = vld [vmem:[%s1 + $0x3c] sm:$0xf]
    %v126 = vunpack.c.l.b16 %v94
    %v127 = vunpack.c.l.b16 %v95
    %v128 = vunpack.c.l.b16 %v96
    %v129 = vunpack.c.l.b16 %v97
    %v130 = vunpack.c.l.b16 %v98
    %v131 = vunpack.c.l.b16 %v99
    %v132 = vunpack.c.l.b16 %v100
    %v133 = vunpack.c.l.b16 %v101
    %v134 = vunpack.c.l.b16 %v102
    %v135 = vunpack.c.l.b16 %v103
    %v136 = vunpack.c.l.b16 %v104
    %v137 = vunpack.c.l.b16 %v105
    %v138 = vunpack.c.l.b16 %v106
    %v139 = vunpack.c.l.b16 %v107
    %v140 = vunpack.c.l.b16 %v108
    %v141 = vunpack.c.l.b16 %v109
    %v142 = vpack.c.b16 %v127, %v126
    %v143 = vpack.c.b16 %v129, %v128
    %v144 = vpack.c.b16 %v131, %v130
    %v145 = vpack.c.b16 %v133, %v132
    %v146 = vpack.c.b16 %v135, %v134
    %v147 = vpack.c.b16 %v137, %v136
    %v148 = vpack.c.b16 %v139, %v138
    %v149 = vpack.c.b16 %v141, %v140
    %158 = vmatprep.subr.bf16.mxu0 0
    %159 = vmatpush1.bf16.msra.mxu0 %v142
    %160 = vmatprep.subr.bf16.mxu0 0
    %161 = vmatpush1.bf16.msra.mxu0 %v143
    %162 = vmatprep.subr.bf16.mxu0 0
    %163 = vmatpush1.bf16.msra.mxu0 %v144
    %164 = vmatprep.subr.bf16.mxu0 0
    %165 = vmatpush1.bf16.msra.mxu0 %v145
    %166 = vmatprep.subr.bf16.mxu0 0
    %167 = vmatpush1.bf16.msra.mxu0 %v146
    %168 = vmatprep.subr.bf16.mxu0 0
    %169 = vmatpush1.bf16.msra.mxu0 %v147
    %170 = vmatprep.subr.bf16.mxu0 0
    %171 = vmatpush1.bf16.msra.mxu0 %v148
    %172 = vmatprep.subr.bf16.mxu0 0
    %173 = vmatpush1.bf16.msra.mxu0 %v149
    %174 = vmatprep.subr.bf16.mxu0 0
    %175 = vmatpush1.bf16.msra.mxu0 0
    %176 = vmatprep.subr.bf16.mxu0 0
    %177 = vmatpush1.bf16.msra.mxu0 0
    %178 = vmatprep.subr.bf16.mxu0 0
    %179 = vmatpush1.bf16.msra.mxu0 0
    %180 = vmatprep.subr.bf16.mxu0 0
    %181 = vmatpush1.bf16.msra.mxu0 0
    %182 = vmatprep.subr.bf16.mxu0 0
    %183 = vmatpush1.bf16.msra.mxu0 0
    %184 = vmatprep.subr.bf16.mxu0 0
    %185 = vmatpush1.bf16.msra.mxu0 0
    %186 = vmatprep.subr.bf16.mxu0 0
    %187 = vmatpush1.bf16.msra.mxu0 0
    %188 = vmatprep.subr.bf16.mxu0 0
    %189 = vmatpush1.bf16.msra.mxu0 0
    %190 = vmatprep.mubr.bf16.mxu0 0
    %191 = vmatmul.mubr.bf16.gmra.mrb[0].mxu0 %v86
    %v192 = vpop.f32.mrb[0].mxu0
    %v193 = vadd.f32 0.0, %v192
    %v194 = vpop.f32.mrb[0].mxu0
    %v195 = vpop.f32.mrb[0].mxu0
    %v196 = vadd.f32 0.0, %v195
    %v197 = vpop.f32.mrb[0].mxu0
    %198 = vmatprep.mubr.bf16.mxu0 0
    %199 = vmatmul.mubr.bf16.gmra.mrb[0].mxu0 %v87
    %v200 = vpop.f32.mrb[0].mxu0
    %v201 = vadd.f32 0.0, %v200
    %v202 = vpop.f32.mrb[0].mxu0
    %v203 = vpop.f32.mrb[0].mxu0
    %v204 = vadd.f32 0.0, %v203
    %v205 = vpop.f32.mrb[0].mxu0
    %206 = vmatprep.mubr.bf16.mxu0 0
    %207 = vmatmul.mubr.bf16.gmra.mrb[0].mxu0 %v88
    %v208 = vpop.f32.mrb[0].mxu0
    %v209 = vadd.f32 0.0, %v208
    %v210 = vpop.f32.mrb[0].mxu0
    %v211 = vpop.f32.mrb[0].mxu0
    %v212 = vadd.f32 0.0, %v211
    %v213 = vpop.f32.mrb[0].mxu0
    %214 = vmatprep.mubr.bf16.mxu0 0
    %215 = vmatmul.mubr.bf16.gmra.mrb[0].mxu0 %v89
    %v216 = vpop.f32.mrb[0].mxu0
    %v217 = vadd.f32 0.0, %v216
    %v218 = vpop.f32.mrb[0].mxu0
    %v219 = vpop.f32.mrb[0].mxu0
    %v220 = vadd.f32 0.0, %v219
    %v221 = vpop.f32.mrb[0].mxu0
    %222 = vmatprep.mubr.bf16.mxu0 0
    %223 = vmatmul.mubr.bf16.gmra.mrb[0].mxu0 %v90
    %v224 = vpop.f32.mrb[0].mxu0
    %v225 = vadd.f32 0.0, %v224
    %v226 = vpop.f32.mrb[0].mxu0
    %v227 = vpop.f32.mrb[0].mxu0
    %v228 = vadd.f32 0.0, %v227
    %v229 = vpop.f32.mrb[0].mxu0
    %230 = vmatprep.mubr.bf16.mxu0 0
    %231 = vmatmul.mubr.bf16.gmra.mrb[0].mxu0 %v91
    %v232 = vpop.f32.mrb[0].mxu0
    %v233 = vadd.f32 0.0, %v232
    %v234 = vpop.f32.mrb[0].mxu0
    %v235 = vpop.f32.mrb[0].mxu0
    %v236 = vadd.f32 0.0, %v235
    %v237 = vpop.f32.mrb[0].mxu0
    %238 = vmatprep.mubr.bf16.mxu0 0
    %239 = vmatmul.mubr.bf16.gmra.mrb[0].mxu0 %v92
    %v240 = vpop.f32.mrb[0].mxu0
    %v241 = vadd.f32 0.0, %v240
    %v242 = vpop.f32.mrb[0].mxu0
    %v243 = vpop.f32.mrb[0].mxu0
    %v244 = vadd.f32 0.0, %v243
    %v245 = vpop.f32.mrb[0].mxu0
    %246 = vmatprep.mubr.bf16.mxu0 0
    %247 = vmatmul.mubr.bf16.gmra.mrb[0].mxu0 %v93
    %v248 = vpop.f32.mrb[0].mxu0
    %v249 = vadd.f32 0.0, %v248
    %v250 = vpop.f32.mrb[0].mxu0
    %v251 = vpop.f32.mrb[0].mxu0
    %v252 = vadd.f32 0.0, %v251
    %v253 = vpop.f32.mrb[0].mxu0
    %254 = vdwg.mxu0
    %v255 = vadd.f32 %v66, %v193
    %v256 = vadd.f32 %v67, %v196
    %v257 = vadd.f32 %v68, %v201
    %v258 = vadd.f32 %v69, %v204
    %v259 = vadd.f32 %v70, %v209
    %v260 = vadd.f32 %v71, %v212
    %v261 = vadd.f32 %v72, %v217
    %v262 = vadd.f32 %v73, %v220
    %v263 = vadd.f32 %v74, %v225
    %v264 = vadd.f32 %v75, %v228
    %v265 = vadd.f32 %v76, %v233
    %v266 = vadd.f32 %v77, %v236
    %v267 = vadd.f32 %v78, %v241
    %v268 = vadd.f32 %v79, %v244
    %v269 = vadd.f32 %v80, %v249
    %v270 = vadd.f32 %v81, %v252
    %271 = vst [vmem:[#allocation2] sm:$0xff] %v255
    %272 = vst [vmem:[#allocation2 + $0x8] sm:$0xff] %v256
    %273 = vst [vmem:[#allocation2 + $0x10] sm:$0xff] %v257
    %274 = vst [vmem:[#allocation2 + $0x18] sm:$0xff] %v258
    %275 = vst [vmem:[#allocation2 + $0x20] sm:$0xff] %v259
    %276 = vst [vmem:[#allocation2 + $0x28] sm:$0xff] %v260
    %277 = vst [vmem:[#allocation2 + $0x30] sm:$0xff] %v261
    %278 = vst [vmem:[#allocation2 + $0x38] sm:$0xff] %v262
    %279 = vst [vmem:[#allocation2 + $0x40] sm:$0xff] %v263
    %280 = vst [vmem:[#allocation2 + $0x48] sm:$0xff] %v264
    %281 = vst [vmem:[#allocation2 + $0x50] sm:$0xff] %v265
    %282 = vst [vmem:[#allocation2 + $0x58] sm:$0xff] %v266
    %283 = vst [vmem:[#allocation2 + $0x60] sm:$0xff] %v267
    %284 = vst [vmem:[#allocation2 + $0x68] sm:$0xff] %v268
    %285 = vst [vmem:[#allocation2 + $0x70] sm:$0xff] %v269
    %286 = vst [vmem:[#allocation2 + $0x78] sm:$0xff] %v270
    // Predicated region
    $region58: #{_forward_impl.3} parent=1 // pred_check
      %p287 = pneg %p46
    $region59: #{_forward_impl.3} parent=1 // pred_check_branch
      %289 = sbr.rel (%p287) target = $region61
    $region60: #{_forward_impl.3} parent=1 // pred_region
      %v290 = vld [vmem:[#allocation2] sm:$0xff]
      %v291 = vld [vmem:[#allocation2 + $0x8] sm:$0xff]
      %v292 = vld [vmem:[#allocation2 + $0x10] sm:$0xff]
      %v293 = vld [vmem:[#allocation2 + $0x18] sm:$0xff]
      %v294 = vld [vmem:[#allocation2 + $0x20] sm:$0xff]
      %v295 = vld [vmem:[#allocation2 + $0x28] sm:$0xff]
      %v296 = vld [vmem:[#allocation2 + $0x30] sm:$0xff]
      %v297 = vld [vmem:[#allocation2 + $0x38] sm:$0xff]
      %v298 = vld [vmem:[#allocation2 + $0x40] sm:$0xff]
      %v299 = vld [vmem:[#allocation2 + $0x48] sm:$0xff]
      %v300 = vld [vmem:[#allocation2 + $0x50] sm:$0xff]
      %v301 = vld [vmem:[#allocation2 + $0x58] sm:$0xff]
      %v302 = vld [vmem:[#allocation2 + $0x60] sm:$0xff]
      %v303 = vld [vmem:[#allocation2 + $0x68] sm:$0xff]
      %v304 = vld [vmem:[#allocation2 + $0x70] sm:$0xff]
      %v305 = vld [vmem:[#allocation2 + $0x78] sm:$0xff]
      %v306 = vld [vmem:[%s3] sm:$0xff]
      %v307 = vld [vmem:[%s3 + $0x8] sm:$0xff]
      %v308 = vld [vmem:[%s3 + $0x10] sm:$0xff]
      %v309 = vld [vmem:[%s3 + $0x18] sm:$0xff]
      %v310 = vld [vmem:[%s3 + $0x20] sm:$0xff]
      %v311 = vld [vmem:[%s3 + $0x28] sm:$0xff]
      %v312 = vld [vmem:[%s3 + $0x30] sm:$0xff]
      %v313 = vld [vmem:[%s3 + $0x38] sm:$0xff]
      %v314 = vld [vmem:[%s3 + $0x40] sm:$0xff]
      %v315 = vld [vmem:[%s3 + $0x48] sm:$0xff]
      %v316 = vld [vmem:[%s3 + $0x50] sm:$0xff]
      %v317 = vld [vmem:[%s3 + $0x58] sm:$0xff]
      %v318 = vld [vmem:[%s3 + $0x60] sm:$0xff]
      %v319 = vld [vmem:[%s3 + $0x68] sm:$0xff]
      %v320 = vld [vmem:[%s3 + $0x70] sm:$0xff]
      %v321 = vld [vmem:[%s3 + $0x78] sm:$0xff]
      %323 = vset.pattern.permute.xlu0 0
      %324 = vperm.xlu0 %323, %v306
      %v325 = vpop.permute.xlu0 %324
      %328 = vset.pattern.permute.xlu0 0
      %329 = vperm.xlu0 %328, %v307
      %v330 = vpop.permute.xlu0 %329
      %333 = vset.pattern.permute.xlu0 0
      %334 = vperm.xlu0 %333, %v308
      %v335 = vpop.permute.xlu0 %334
      %338 = vset.pattern.permute.xlu0 0
      %339 = vperm.xlu0 %338, %v309
      %v340 = vpop.permute.xlu0 %339
      %343 = vset.pattern.permute.xlu0 0
      %344 = vperm.xlu0 %343, %v310
      %v345 = vpop.permute.xlu0 %344
      %348 = vset.pattern.permute.xlu0 0
      %349 = vperm.xlu0 %348, %v311
      %v350 = vpop.permute.xlu0 %349
      %353 = vset.pattern.permute.xlu0 0
      %354 = vperm.xlu0 %353, %v312
      %v355 = vpop.permute.xlu0 %354
      %358 = vset.pattern.permute.xlu0 0
      %359 = vperm.xlu0 %358, %v313
      %v360 = vpop.permute.xlu0 %359
      %363 = vset.pattern.permute.xlu0 0
      %364 = vperm.xlu0 %363, %v314
      %v365 = vpop.permute.xlu0 %364
      %368 = vset.pattern.permute.xlu0 0
      %369 = vperm.xlu0 %368, %v315
      %v370 = vpop.permute.xlu0 %369
      %373 = vset.pattern.permute.xlu0 0
      %374 = vperm.xlu0 %373, %v316
      %v375 = vpop.permute.xlu0 %374
      %378 = vset.pattern.permute.xlu0 0
      %379 = vperm.xlu0 %378, %v317
      %v380 = vpop.permute.xlu0 %379
      %383 = vset.pattern.permute.xlu0 0
      %384 = vperm.xlu0 %383, %v318
      %v385 = vpop.permute.xlu0 %384
      %388 = vset.pattern.permute.xlu0 0
      %389 = vperm.xlu0 %388, %v319
      %v390 = vpop.permute.xlu0 %389
      %393 = vset.pattern.permute.xlu0 0
      %394 = vperm.xlu0 %393, %v320
      %v395 = vpop.permute.xlu0 %394
      %398 = vset.pattern.permute.xlu0 0
      %399 = vperm.xlu0 %398, %v321
      %v400 = vpop.permute.xlu0 %399
      %v402 = vmul.f32 %v290, %v325
      %v403 = vmul.f32 %v291, %v330
      %v404 = vmul.f32 %v292, %v335
      %v405 = vmul.f32 %v293, %v340
      %v406 = vmul.f32 %v294, %v345
      %v407 = vmul.f32 %v295, %v350
      %v408 = vmul.f32 %v296, %v355
      %v409 = vmul.f32 %v297, %v360
      %v410 = vmul.f32 %v298, %v365
      %v411 = vmul.f32 %v299, %v370
      %v412 = vmul.f32 %v300, %v375
      %v413 = vmul.f32 %v301, %v380
      %v414 = vmul.f32 %v302, %v385
      %v415 = vmul.f32 %v303, %v390
      %v416 = vmul.f32 %v304, %v395
      %v417 = vmul.f32 %v305, %v400
      %v418 = vpack.c.bf16 %v403, %v402
      %v419 = vpack.c.bf16 %v405, %v404
      %v420 = vpack.c.bf16 %v407, %v406
      %v421 = vpack.c.bf16 %v409, %v408
      %v422 = vpack.c.bf16 %v411, %v410
      %v423 = vpack.c.bf16 %v413, %v412
      %v424 = vpack.c.bf16 %v415, %v414
      %v425 = vpack.c.bf16 %v417, %v416
      %v426 = vld [vmem:[%s2] sm:$0xf]
      %v427 = vld [vmem:[%s2 + $0x4] sm:$0xf]
      %v428 = vld [vmem:[%s2 + $0x8] sm:$0xf]
      %v429 = vld [vmem:[%s2 + $0xc] sm:$0xf]
      %v430 = vld [vmem:[%s2 + $0x10] sm:$0xf]
      %v431 = vld [vmem:[%s2 + $0x14] sm:$0xf]
      %v432 = vld [vmem:[%s2 + $0x18] sm:$0xf]
      %v433 = vld [vmem:[%s2 + $0x1c] sm:$0xf]
      %v434 = vld [vmem:[%s2 + $0x20] sm:$0xf]
      %v435 = vld [vmem:[%s2 + $0x24] sm:$0xf]
      %v436 = vld [vmem:[%s2 + $0x28] sm:$0xf]
      %v437 = vld [vmem:[%s2 + $0x2c] sm:$0xf]
      %v438 = vld [vmem:[%s2 + $0x30] sm:$0xf]
      %v439 = vld [vmem:[%s2 + $0x34] sm:$0xf]
      %v440 = vld [vmem:[%s2 + $0x38] sm:$0xf]
      %v441 = vld [vmem:[%s2 + $0x3c] sm:$0xf]
      %v442 = vld [vmem:[%s4] sm:$0xf]
      %v443 = vld [vmem:[%s4 + $0x4] sm:$0xf]
      %v444 = vld [vmem:[%s4 + $0x8] sm:$0xf]
      %v445 = vld [vmem:[%s4 + $0xc] sm:$0xf]
      %v446 = vld [vmem:[%s4 + $0x10] sm:$0xf]
      %v447 = vld [vmem:[%s4 + $0x14] sm:$0xf]
      %v448 = vld [vmem:[%s4 + $0x18] sm:$0xf]
      %v449 = vld [vmem:[%s4 + $0x1c] sm:$0xf]
      %v450 = vld [vmem:[%s4 + $0x20] sm:$0xf]
      %v451 = vld [vmem:[%s4 + $0x24] sm:$0xf]
      %v452 = vld [vmem:[%s4 + $0x28] sm:$0xf]
      %v453 = vld [vmem:[%s4 + $0x2c] sm:$0xf]
      %v454 = vld [vmem:[%s4 + $0x30] sm:$0xf]
      %v455 = vld [vmem:[%s4 + $0x34] sm:$0xf]
      %v456 = vld [vmem:[%s4 + $0x38] sm:$0xf]
      %v457 = vld [vmem:[%s4 + $0x3c] sm:$0xf]
      %v458 = vld [vmem:[%s5] sm:$0xf]
      %v459 = vld [vmem:[%s5 + $0x4] sm:$0xf]
      %v460 = vld [vmem:[%s5 + $0x8] sm:$0xf]
      %v461 = vld [vmem:[%s5 + $0xc] sm:$0xf]
      %v462 = vld [vmem:[%s5 + $0x10] sm:$0xf]
      %v463 = vld [vmem:[%s5 + $0x14] sm:$0xf]
      %v464 = vld [vmem:[%s5 + $0x18] sm:$0xf]
      %v465 = vld [vmem:[%s5 + $0x1c] sm:$0xf]
      %v466 = vld [vmem:[%s5 + $0x20] sm:$0xf]
      %v467 = vld [vmem:[%s5 + $0x24] sm:$0xf]
      %v468 = vld [vmem:[%s5 + $0x28] sm:$0xf]
      %v469 = vld [vmem:[%s5 + $0x2c] sm:$0xf]
      %v470 = vld [vmem:[%s5 + $0x30] sm:$0xf]
      %v471 = vld [vmem:[%s5 + $0x34] sm:$0xf]
      %v472 = vld [vmem:[%s5 + $0x38] sm:$0xf]
      %v473 = vld [vmem:[%s5 + $0x3c] sm:$0xf]
      %v490 = vunpack.c.l.b16 %v458
      %v491 = vunpack.c.l.b16 %v459
      %v492 = vunpack.c.l.b16 %v460
      %v493 = vunpack.c.l.b16 %v461
      %v494 = vunpack.c.l.b16 %v462
      %v495 = vunpack.c.l.b16 %v463
      %v496 = vunpack.c.l.b16 %v464
      %v497 = vunpack.c.l.b16 %v465
      %v498 = vunpack.c.l.b16 %v466
      %v499 = vunpack.c.l.b16 %v467
      %v500 = vunpack.c.l.b16 %v468
      %v501 = vunpack.c.l.b16 %v469
      %v502 = vunpack.c.l.b16 %v470
      %v503 = vunpack.c.l.b16 %v471
      %v504 = vunpack.c.l.b16 %v472
      %v505 = vunpack.c.l.b16 %v473
      %v506 = vpack.c.b16 %v491, %v490
      %v507 = vpack.c.b16 %v493, %v492
      %v508 = vpack.c.b16 %v495, %v494
      %v509 = vpack.c.b16 %v497, %v496
      %v510 = vpack.c.b16 %v499, %v498
      %v511 = vpack.c.b16 %v501, %v500
      %v512 = vpack.c.b16 %v503, %v502
      %v513 = vpack.c.b16 %v505, %v504
      %522 = vmatprep.subr.bf16.mxu0 0
      %523 = vmatpush1.bf16.msra.mxu0 %v506
      %524 = vmatprep.subr.bf16.mxu0 0
      %525 = vmatpush1.bf16.msra.mxu0 %v507
      %526 = vmatprep.subr.bf16.mxu0 0
      %527 = vmatpush1.bf16.msra.mxu0 %v508
      %528 = vmatprep.subr.bf16.mxu0 0
      %529 = vmatpush1.bf16.msra.mxu0 %v509
      %530 = vmatprep.subr.bf16.mxu0 0
      %531 = vmatpush1.bf16.msra.mxu0 %v510
      %532 = vmatprep.subr.bf16.mxu0 0
      %533 = vmatpush1.bf16.msra.mxu0 %v511
      %534 = vmatprep.subr.bf16.mxu0 0
      %535 = vmatpush1.bf16.msra.mxu0 %v512
      %536 = vmatprep.subr.bf16.mxu0 0
      %537 = vmatpush1.bf16.msra.mxu0 %v513
      %538 = vmatprep.subr.bf16.mxu0 0
      %539 = vmatpush1.bf16.msra.mxu0 0
      %540 = vmatprep.subr.bf16.mxu0 0
      %541 = vmatpush1.bf16.msra.mxu0 0
      %542 = vmatprep.subr.bf16.mxu0 0
      %543 = vmatpush1.bf16.msra.mxu0 0
      %544 = vmatprep.subr.bf16.mxu0 0
      %545 = vmatpush1.bf16.msra.mxu0 0
      %546 = vmatprep.subr.bf16.mxu0 0
      %547 = vmatpush1.bf16.msra.mxu0 0
      %548 = vmatprep.subr.bf16.mxu0 0
      %549 = vmatpush1.bf16.msra.mxu0 0
      %550 = vmatprep.subr.bf16.mxu0 0
      %551 = vmatpush1.bf16.msra.mxu0 0
      %552 = vmatprep.subr.bf16.mxu0 0
      %553 = vmatpush1.bf16.msra.mxu0 0
      %554 = vmatprep.mubr.bf16.mxu0 0
      %555 = vmatmul.mubr.bf16.gmra.mrb[0].mxu0 %v418
      %v556 = vpop.f32.mrb[0].mxu0
      %v557 = vadd.f32 0.0, %v556
      %v558 = vpop.f32.mrb[0].mxu0
      %v559 = vpop.f32.mrb[0].mxu0
      %v560 = vadd.f32 0.0, %v559
      %v561 = vpop.f32.mrb[0].mxu0
      %562 = vmatprep.mubr.bf16.mxu0 0
      %563 = vmatmul.mubr.bf16.gmra.mrb[0].mxu0 %v419
      %v564 = vpop.f32.mrb[0].mxu0
      %v565 = vadd.f32 0.0, %v564
      %v566 = vpop.f32.mrb[0].mxu0
      %v567 = vpop.f32.mrb[0].mxu0
      %v568 = vadd.f32 0.0, %v567
      %v569 = vpop.f32.mrb[0].mxu0
      %570 = vmatprep.mubr.bf16.mxu0 0
      %571 = vmatmul.mubr.bf16.gmra.mrb[0].mxu0 %v420
      %v572 = vpop.f32.mrb[0].mxu0
      %v573 = vadd.f32 0.0, %v572
      %v574 = vpop.f32.mrb[0].mxu0
      %v575 = vpop.f32.mrb[0].mxu0
      %v576 = vadd.f32 0.0, %v575
      %v577 = vpop.f32.mrb[0].mxu0
      %578 = vmatprep.mubr.bf16.mxu0 0
      %579 = vmatmul.mubr.bf16.gmra.mrb[0].mxu0 %v421
      %v580 = vpop.f32.mrb[0].mxu0
      %v581 = vadd.f32 0.0, %v580
      %v582 = vpop.f32.mrb[0].mxu0
      %v583 = vpop.f32.mrb[0].mxu0
      %v584 = vadd.f32 0.0, %v583
      %v585 = vpop.f32.mrb[0].mxu0
      %586 = vmatprep.mubr.bf16.mxu0 0
      %587 = vmatmul.mubr.bf16.gmra.mrb[0].mxu0 %v422
      %v588 = vpop.f32.mrb[0].mxu0
      %v589 = vadd.f32 0.0, %v588
      %v590 = vpop.f32.mrb[0].mxu0
      %v591 = vpop.f32.mrb[0].mxu0
      %v592 = vadd.f32 0.0, %v591
      %v593 = vpop.f32.mrb[0].mxu0
      %594 = vmatprep.mubr.bf16.mxu0 0
      %595 = vmatmul.mubr.bf16.gmra.mrb[0].mxu0 %v423
      %v596 = vpop.f32.mrb[0].mxu0
      %v597 = vadd.f32 0.0, %v596
      %v598 = vpop.f32.mrb[0].mxu0
      %v599 = vpop.f32.mrb[0].mxu0
      %v600 = vadd.f32 0.0, %v599
      %v601 = vpop.f32.mrb[0].mxu0
      %602 = vmatprep.mubr.bf16.mxu0 0
      %603 = vmatmul.mubr.bf16.gmra.mrb[0].mxu0 %v424
      %v604 = vpop.f32.mrb[0].mxu0
      %v605 = vadd.f32 0.0, %v604
      %v606 = vpop.f32.mrb[0].mxu0
      %v607 = vpop.f32.mrb[0].mxu0
      %v608 = vadd.f32 0.0, %v607
      %v609 = vpop.f32.mrb[0].mxu0
      %610 = vmatprep.mubr.bf16.mxu0 0
      %611 = vmatmul.mubr.bf16.gmra.mrb[0].mxu0 %v425
      %v612 = vpop.f32.mrb[0].mxu0
      %v613 = vadd.f32 0.0, %v612
      %v614 = vpop.f32.mrb[0].mxu0
      %v615 = vpop.f32.mrb[0].mxu0
      %v616 = vadd.f32 0.0, %v615
      %v617 = vpop.f32.mrb[0].mxu0
      %618 = vdwg.mxu0
      %v635 = vunpack.c.l.b16 %v426
      %v636 = vunpack.c.l.b16 %v427
      %v637 = vunpack.c.l.b16 %v428
      %v638 = vunpack.c.l.b16 %v429
      %v639 = vunpack.c.l.b16 %v430
      %v640 = vunpack.c.l.b16 %v431
      %v641 = vunpack.c.l.b16 %v432
      %v642 = vunpack.c.l.b16 %v433
      %v643 = vunpack.c.l.b16 %v434
      %v644 = vunpack.c.l.b16 %v435
      %v645 = vunpack.c.l.b16 %v436
      %v646 = vunpack.c.l.b16 %v437
      %v647 = vunpack.c.l.b16 %v438
      %v648 = vunpack.c.l.b16 %v439
      %v649 = vunpack.c.l.b16 %v440
      %v650 = vunpack.c.l.b16 %v441
      %v651 = vpack.c.b16 %v636, %v635
      %v652 = vpack.c.b16 %v638, %v637
      %v653 = vpack.c.b16 %v640, %v639
      %v654 = vpack.c.b16 %v642, %v641
      %v655 = vpack.c.b16 %v644, %v643
      %v656 = vpack.c.b16 %v646, %v645
      %v657 = vpack.c.b16 %v648, %v647
      %v658 = vpack.c.b16 %v650, %v649
      %v683 = vunpack.c.l.b16 %v442
      %v684 = vunpack.c.l.b16 %v443
      %v685 = vunpack.c.l.b16 %v444
      %v686 = vunpack.c.l.b16 %v445
      %v687 = vunpack.c.l.b16 %v446
      %v688 = vunpack.c.l.b16 %v447
      %v689 = vunpack.c.l.b16 %v448
      %v690 = vunpack.c.l.b16 %v449
      %v691 = vunpack.c.l.b16 %v450
      %v692 = vunpack.c.l.b16 %v451
      %v693 = vunpack.c.l.b16 %v452
      %v694 = vunpack.c.l.b16 %v453
      %v695 = vunpack.c.l.b16 %v454
      %v696 = vunpack.c.l.b16 %v455
      %v697 = vunpack.c.l.b16 %v456
      %v698 = vunpack.c.l.b16 %v457
      %v699 = vpack.c.b16 %v684, %v683
      %v700 = vpack.c.b16 %v686, %v685
      %v701 = vpack.c.b16 %v688, %v687
      %v702 = vpack.c.b16 %v690, %v689
      %v703 = vpack.c.b16 %v692, %v691
      %v704 = vpack.c.b16 %v694, %v693
      %v705 = vpack.c.b16 %v696, %v695
      %v706 = vpack.c.b16 %v698, %v697
      %715 = vmatprep.subr.bf16.mxu0 0
      %716 = vmatpush1.bf16.msra.mxu0 %v699
      %717 = vmatprep.subr.bf16.mxu0 0
      %718 = vmatpush1.bf16.msra.mxu0 %v700
      %719 = vmatprep.subr.bf16.mxu0 0
      %720 = vmatpush1.bf16.msra.mxu0 %v701
      %721 = vmatprep.subr.bf16.mxu0 0
      %722 = vmatpush1.bf16.msra.mxu0 %v702
      %723 = vmatprep.subr.bf16.mxu0 0
      %724 = vmatpush1.bf16.msra.mxu0 %v703
      %725 = vmatprep.subr.bf16.mxu0 0
      %726 = vmatpush1.bf16.msra.mxu0 %v704
      %727 = vmatprep.subr.bf16.mxu0 0
      %728 = vmatpush1.bf16.msra.mxu0 %v705
      %729 = vmatprep.subr.bf16.mxu0 0
      %730 = vmatpush1.bf16.msra.mxu0 %v706
      %731 = vmatprep.subr.bf16.mxu0 0
      %732 = vmatpush1.bf16.msra.mxu0 0
      %733 = vmatprep.subr.bf16.mxu0 0
      %734 = vmatpush1.bf16.msra.mxu0 0
      %735 = vmatprep.subr.bf16.mxu0 0
      %736 = vmatpush1.bf16.msra.mxu0 0
      %737 = vmatprep.subr.bf16.mxu0 0
      %738 = vmatpush1.bf16.msra.mxu0 0
      %739 = vmatprep.subr.bf16.mxu0 0
      %740 = vmatpush1.bf16.msra.mxu0 0
      %741 = vmatprep.subr.bf16.mxu0 0
      %742 = vmatpush1.bf16.msra.mxu0 0
      %743 = vmatprep.subr.bf16.mxu0 0
      %744 = vmatpush1.bf16.msra.mxu0 0
      %745 = vmatprep.subr.bf16.mxu0 0
      %746 = vmatpush1.bf16.msra.mxu0 0
      %747 = vmatprep.mubr.bf16.mxu0 0
      %748 = vmatmul.mubr.bf16.gmra.mrb[0].mxu0 %v651
      %v749 = vpop.f32.mrb[0].mxu0
      %v750 = vadd.f32 %v557, %v749
      %v751 = vpop.f32.mrb[0].mxu0
      %v752 = vpop.f32.mrb[0].mxu0
      %v753 = vadd.f32 %v560, %v752
      %v754 = vpop.f32.mrb[0].mxu0
      %755 = vmatprep.mubr.bf16.mxu0 0
      %756 = vmatmul.mubr.bf16.gmra.mrb[0].mxu0 %v652
      %v757 = vpop.f32.mrb[0].mxu0
      %v758 = vadd.f32 %v565, %v757
      %v759 = vpop.f32.mrb[0].mxu0
      %v760 = vpop.f32.mrb[0].mxu0
      %v761 = vadd.f32 %v568, %v760
      %v762 = vpop.f32.mrb[0].mxu0
      %763 = vmatprep.mubr.bf16.mxu0 0
      %764 = vmatmul.mubr.bf16.gmra.mrb[0].mxu0 %v653
      %v765 = vpop.f32.mrb[0].mxu0
      %v766 = vadd.f32 %v573, %v765
      %v767 = vpop.f32.mrb[0].mxu0
      %v768 = vpop.f32.mrb[0].mxu0
      %v769 = vadd.f32 %v576, %v768
      %v770 = vpop.f32.mrb[0].mxu0
      %771 = vmatprep.mubr.bf16.mxu0 0
      %772 = vmatmul.mubr.bf16.gmra.mrb[0].mxu0 %v654
      %v773 = vpop.f32.mrb[0].mxu0
      %v774 = vadd.f32 %v581, %v773
      %v775 = vpop.f32.mrb[0].mxu0
      %v776 = vpop.f32.mrb[0].mxu0
      %v777 = vadd.f32 %v584, %v776
      %v778 = vpop.f32.mrb[0].mxu0
      %779 = vmatprep.mubr.bf16.mxu0 0
      %780 = vmatmul.mubr.bf16.gmra.mrb[0].mxu0 %v655
      %v781 = vpop.f32.mrb[0].mxu0
      %v782 = vadd.f32 %v589, %v781
      %v783 = vpop.f32.mrb[0].mxu0
      %v784 = vpop.f32.mrb[0].mxu0
      %v785 = vadd.f32 %v592, %v784
      %v786 = vpop.f32.mrb[0].mxu0
      %787 = vmatprep.mubr.bf16.mxu0 0
      %788 = vmatmul.mubr.bf16.gmra.mrb[0].mxu0 %v656
      %v789 = vpop.f32.mrb[0].mxu0
      %v790 = vadd.f32 %v597, %v789
      %v791 = vpop.f32.mrb[0].mxu0
      %v792 = vpop.f32.mrb[0].mxu0
      %v793 = vadd.f32 %v600, %v792
      %v794 = vpop.f32.mrb[0].mxu0
      %795 = vmatprep.mubr.bf16.mxu0 0
      %796 = vmatmul.mubr.bf16.gmra.mrb[0].mxu0 %v657
      %v797 = vpop.f32.mrb[0].mxu0
      %v798 = vadd.f32 %v605, %v797
      %v799 = vpop.f32.mrb[0].mxu0
      %v800 = vpop.f32.mrb[0].mxu0
      %v801 = vadd.f32 %v608, %v800
      %v802 = vpop.f32.mrb[0].mxu0
      %803 = vmatprep.mubr.bf16.mxu0 0
      %804 = vmatmul.mubr.bf16.gmra.mrb[0].mxu0 %v658
      %v805 = vpop.f32.mrb[0].mxu0
      %v806 = vadd.f32 %v613, %v805
      %v807 = vpop.f32.mrb[0].mxu0
      %v808 = vpop.f32.mrb[0].mxu0
      %v809 = vadd.f32 %v616, %v808
      %v810 = vpop.f32.mrb[0].mxu0
      %811 = vdwg.mxu0
      %v812 = vld [vmem:[%s6] sm:$0x1]
      %v814 = vlaneseq
      %v815 = vshrl.u32 %v814, 7
      %v816 = vsub.s32 0, %v815
      %v817 = vrot.slane %v812, %v816
      %v819 = vadd.f32 %v750, %v817
      %v820 = vadd.f32 %v753, %v817
      %v821 = vadd.f32 %v758, %v817
      %v822 = vadd.f32 %v761, %v817
      %v823 = vadd.f32 %v766, %v817
      %v824 = vadd.f32 %v769, %v817
      %v825 = vadd.f32 %v774, %v817
      %v826 = vadd.f32 %v777, %v817
      %v827 = vadd.f32 %v782, %v817
      %v828 = vadd.f32 %v785, %v817
      %v829 = vadd.f32 %v790, %v817
      %v830 = vadd.f32 %v793, %v817
      %v831 = vadd.f32 %v798, %v817
      %v832 = vadd.f32 %v801, %v817
      %v833 = vadd.f32 %v806, %v817
      %v834 = vadd.f32 %v809, %v817
      %v835 = vmax.f32 %v819, 0.0
      %v836 = vmax.f32 %v820, 0.0
      %v837 = vmax.f32 %v821, 0.0
      %v838 = vmax.f32 %v822, 0.0
      %v839 = vmax.f32 %v823, 0.0
      %v840 = vmax.f32 %v824, 0.0
      %v841 = vmax.f32 %v825, 0.0
      %v842 = vmax.f32 %v826, 0.0
      %v843 = vmax.f32 %v827, 0.0
      %v844 = vmax.f32 %v828, 0.0
      %v845 = vmax.f32 %v829, 0.0
      %v846 = vmax.f32 %v830, 0.0
      %v847 = vmax.f32 %v831, 0.0
      %v848 = vmax.f32 %v832, 0.0
      %v849 = vmax.f32 %v833, 0.0
      %v850 = vmax.f32 %v834, 0.0
      %v851 = vpack.c.bf16 %v836, %v835
      %v852 = vpack.c.bf16 %v838, %v837
      %v853 = vpack.c.bf16 %v840, %v839
      %v854 = vpack.c.bf16 %v842, %v841
      %v855 = vpack.c.bf16 %v844, %v843
      %v856 = vpack.c.bf16 %v846, %v845
      %v857 = vpack.c.bf16 %v848, %v847
      %v858 = vpack.c.bf16 %v850, %v849
      %v859 = vld [vmem:[%s7] sm:$0xf]
      %v860 = vld [vmem:[%s7 + $0x4] sm:$0xf]
      %v861 = vld [vmem:[%s7 + $0x8] sm:$0xf]
      %v862 = vld [vmem:[%s7 + $0xc] sm:$0xf]
      %v863 = vld [vmem:[%s7 + $0x10] sm:$0xf]
      %v864 = vld [vmem:[%s7 + $0x14] sm:$0xf]
      %v865 = vld [vmem:[%s7 + $0x18] sm:$0xf]
      %v866 = vld [vmem:[%s7 + $0x1c] sm:$0xf]
      %v867 = vld [vmem:[%s7 + $0x20] sm:$0xf]
      %v868 = vld [vmem:[%s7 + $0x24] sm:$0xf]
      %v869 = vld [vmem:[%s7 + $0x28] sm:$0xf]
      %v870 = vld [vmem:[%s7 + $0x2c] sm:$0xf]
      %v871 = vld [vmem:[%s7 + $0x30] sm:$0xf]
      %v872 = vld [vmem:[%s7 + $0x34] sm:$0xf]
      %v873 = vld [vmem:[%s7 + $0x38] sm:$0xf]
      %v874 = vld [vmem:[%s7 + $0x3c] sm:$0xf]
      %v875 = vld [vmem:[%s8] sm:$0x1]
      %v877 = vlaneseq
      %v878 = vshrl.u32 %v877, 7
      %v879 = vsub.s32 0, %v878
      %v880 = vrot.slane %v875, %v879
      %v898 = vunpack.c.l.b16 %v859
      %v899 = vunpack.c.l.b16 %v860
      %v900 = vunpack.c.l.b16 %v861
      %v901 = vunpack.c.l.b16 %v862
      %v902 = vunpack.c.l.b16 %v863
      %v903 = vunpack.c.l.b16 %v864
      %v904 = vunpack.c.l.b16 %v865
      %v905 = vunpack.c.l.b16 %v866
      %v906 = vunpack.c.l.b16 %v867
      %v907 = vunpack.c.l.b16 %v868
      %v908 = vunpack.c.l.b16 %v869
      %v909 = vunpack.c.l.b16 %v870
      %v910 = vunpack.c.l.b16 %v871
      %v911 = vunpack.c.l.b16 %v872
      %v912 = vunpack.c.l.b16 %v873
      %v913 = vunpack.c.l.b16 %v874
      %v914 = vpack.c.b16 %v899, %v898
      %v915 = vpack.c.b16 %v901, %v900
      %v916 = vpack.c.b16 %v903, %v902
      %v917 = vpack.c.b16 %v905, %v904
      %v918 = vpack.c.b16 %v907, %v906
      %v919 = vpack.c.b16 %v909, %v908
      %v920 = vpack.c.b16 %v911, %v910
      %v921 = vpack.c.b16 %v913, %v912
      %930 = vmatprep.subr.bf16.mxu0 0
      %931 = vmatpush1.bf16.msra.mxu0 %v914
      %932 = vmatprep.subr.bf16.mxu0 0
      %933 = vmatpush1.bf16.msra.mxu0 %v915
      %934 = vmatprep.subr.bf16.mxu0 0
      %935 = vmatpush1.bf16.msra.mxu0 %v916
      %936 = vmatprep.subr.bf16.mxu0 0
      %937 = vmatpush1.bf16.msra.mxu0 %v917
      %938 = vmatprep.subr.bf16.mxu0 0
      %939 = vmatpush1.bf16.msra.mxu0 %v918
      %940 = vmatprep.subr.bf16.mxu0 0
      %941 = vmatpush1.bf16.msra.mxu0 %v919
      %942 = vmatprep.subr.bf16.mxu0 0
      %943 = vmatpush1.bf16.msra.mxu0 %v920
      %944 = vmatprep.subr.bf16.mxu0 0
      %945 = vmatpush1.bf16.msra.mxu0 %v921
      %946 = vmatprep.subr.bf16.mxu0 0
      %947 = vmatpush1.bf16.msra.mxu0 0
      %948 = vmatprep.subr.bf16.mxu0 0
      %949 = vmatpush1.bf16.msra.mxu0 0
      %950 = vmatprep.subr.bf16.mxu0 0
      %951 = vmatpush1.bf16.msra.mxu0 0
      %952 = vmatprep.subr.bf16.mxu0 0
      %953 = vmatpush1.bf16.msra.mxu0 0
      %954 = vmatprep.subr.bf16.mxu0 0
      %955 = vmatpush1.bf16.msra.mxu0 0
      %956 = vmatprep.subr.bf16.mxu0 0
      %957 = vmatpush1.bf16.msra.mxu0 0
      %958 = vmatprep.subr.bf16.mxu0 0
      %959 = vmatpush1.bf16.msra.mxu0 0
      %960 = vmatprep.subr.bf16.mxu0 0
      %961 = vmatpush1.bf16.msra.mxu0 0
      %962 = vmatprep.mubr.bf16.mxu0 0
      %963 = vmatmul.mubr.bf16.gmra.mrb[0].mxu0 %v851
      %v964 = vpop.f32.mrb[0].mxu0
      %v965 = vadd.f32 %v880, %v964
      %v966 = vpop.f32.mrb[0].mxu0
      %v967 = vpop.f32.mrb[0].mxu0
      %v968 = vadd.f32 %v880, %v967
      %v969 = vpop.f32.mrb[0].mxu0
      %970 = vmatprep.mubr.bf16.mxu0 0
      %971 = vmatmul.mubr.bf16.gmra.mrb[0].mxu0 %v852
      %v972 = vpop.f32.mrb[0].mxu0
      %v973 = vadd.f32 %v880, %v972
      %v974 = vpop.f32.mrb[0].mxu0
      %v975 = vpop.f32.mrb[0].mxu0
      %v976 = vadd.f32 %v880, %v975
      %v977 = vpop.f32.mrb[0].mxu0
      %978 = vmatprep.mubr.bf16.mxu0 0
      %979 = vmatmul.mubr.bf16.gmra.mrb[0].mxu0 %v853
      %v980 = vpop.f32.mrb[0].mxu0
      %v981 = vadd.f32 %v880, %v980
      %v982 = vpop.f32.mrb[0].mxu0
      %v983 = vpop.f32.mrb[0].mxu0
      %v984 = vadd.f32 %v880, %v983
      %v985 = vpop.f32.mrb[0].mxu0
      %986 = vmatprep.mubr.bf16.mxu0 0
      %987 = vmatmul.mubr.bf16.gmra.mrb[0].mxu0 %v854
      %v988 = vpop.f32.mrb[0].mxu0
      %v989 = vadd.f32 %v880, %v988
      %v990 = vpop.f32.mrb[0].mxu0
      %v991 = vpop.f32.mrb[0].mxu0
      %v992 = vadd.f32 %v880, %v991
      %v993 = vpop.f32.mrb[0].mxu0
      %994 = vmatprep.mubr.bf16.mxu0 0
      %995 = vmatmul.mubr.bf16.gmra.mrb[0].mxu0 %v855
      %v996 = vpop.f32.mrb[0].mxu0
      %v997 = vadd.f32 %v880, %v996
      %v998 = vpop.f32.mrb[0].mxu0
      %v999 = vpop.f32.mrb[0].mxu0
      %v1000 = vadd.f32 %v880, %v999
      %v1001 = vpop.f32.mrb[0].mxu0
      %1002 = vmatprep.mubr.bf16.mxu0 0
      %1003 = vmatmul.mubr.bf16.gmra.mrb[0].mxu0 %v856
      %v1004 = vpop.f32.mrb[0].mxu0
      %v1005 = vadd.f32 %v880, %v1004
      %v1006 = vpop.f32.mrb[0].mxu0
      %v1007 = vpop.f32.mrb[0].mxu0
      %v1008 = vadd.f32 %v880, %v1007
      %v1009 = vpop.f32.mrb[0].mxu0
      %1010 = vmatprep.mubr.bf16.mxu0 0
      %1011 = vmatmul.mubr.bf16.gmra.mrb[0].mxu0 %v857
      %v1012 = vpop.f32.mrb[0].mxu0
      %v1013 = vadd.f32 %v880, %v1012
      %v1014 = vpop.f32.mrb[0].mxu0
      %v1015 = vpop.f32.mrb[0].mxu0
      %v1016 = vadd.f32 %v880, %v1015
      %v1017 = vpop.f32.mrb[0].mxu0
      %1018 = vmatprep.mubr.bf16.mxu0 0
      %1019 = vmatmul.mubr.bf16.gmra.mrb[0].mxu0 %v858
      %v1020 = vpop.f32.mrb[0].mxu0
      %v1021 = vadd.f32 %v880, %v1020
      %v1022 = vpop.f32.mrb[0].mxu0
      %v1023 = vpop.f32.mrb[0].mxu0
      %v1024 = vadd.f32 %v880, %v1023
      %v1025 = vpop.f32.mrb[0].mxu0
      %1026 = vdwg.mxu0
      %v1027 = vmax.f32 %v965, 0.0
      %v1028 = vmax.f32 %v968, 0.0
      %v1029 = vmax.f32 %v973, 0.0
      %v1030 = vmax.f32 %v976, 0.0
      %v1031 = vmax.f32 %v981, 0.0
      %v1032 = vmax.f32 %v984, 0.0
      %v1033 = vmax.f32 %v989, 0.0
      %v1034 = vmax.f32 %v992, 0.0
      %v1035 = vmax.f32 %v997, 0.0
      %v1036 = vmax.f32 %v1000, 0.0
      %v1037 = vmax.f32 %v1005, 0.0
      %v1038 = vmax.f32 %v1008, 0.0
      %v1039 = vmax.f32 %v1013, 0.0
      %v1040 = vmax.f32 %v1016, 0.0
      %v1041 = vmax.f32 %v1021, 0.0
      %v1042 = vmax.f32 %v1024, 0.0
      %v1043 = vpack.c.bf16 %v1028, %v1027
      %v1044 = vpack.c.bf16 %v1030, %v1029
      %v1045 = vpack.c.bf16 %v1032, %v1031
      %v1046 = vpack.c.bf16 %v1034, %v1033
      %v1047 = vpack.c.bf16 %v1036, %v1035
      %v1048 = vpack.c.bf16 %v1038, %v1037
      %v1049 = vpack.c.bf16 %v1040, %v1039
      %v1050 = vpack.c.bf16 %v1042, %v1041
      %v1051 = vld [vmem:[%s9] sm:$0xf]
      %v1052 = vld [vmem:[%s9 + $0x4] sm:$0xf]
      %v1053 = vld [vmem:[%s9 + $0x8] sm:$0xf]
      %v1054 = vld [vmem:[%s9 + $0xc] sm:$0xf]
      %v1055 = vld [vmem:[%s9 + $0x10] sm:$0xf]
      %v1056 = vld [vmem:[%s9 + $0x14] sm:$0xf]
      %v1057 = vld [vmem:[%s9 + $0x18] sm:$0xf]
      %v1058 = vld [vmem:[%s9 + $0x1c] sm:$0xf]
      %v1059 = vld [vmem:[%s9 + $0x20] sm:$0xf]
      %v1060 = vld [vmem:[%s9 + $0x24] sm:$0xf]
      %v1061 = vld [vmem:[%s9 + $0x28] sm:$0xf]
      %v1062 = vld [vmem:[%s9 + $0x2c] sm:$0xf]
      %v1063 = vld [vmem:[%s9 + $0x30] sm:$0xf]
      %v1064 = vld [vmem:[%s9 + $0x34] sm:$0xf]
      %v1065 = vld [vmem:[%s9 + $0x38] sm:$0xf]
      %v1066 = vld [vmem:[%s9 + $0x3c] sm:$0xf]
      %v1067 = vld [vmem:[%s10] sm:$0x1]
      %v1069 = vlaneseq
      %v1070 = vshrl.u32 %v1069, 7
      %v1071 = vsub.s32 0, %v1070
      %v1072 = vrot.slane %v1067, %v1071
      %v1090 = vunpack.c.l.b16 %v1051
      %v1091 = vunpack.c.l.b16 %v1052
      %v1092 = vunpack.c.l.b16 %v1053
      %v1093 = vunpack.c.l.b16 %v1054
      %v1094 = vunpack.c.l.b16 %v1055
      %v1095 = vunpack.c.l.b16 %v1056
      %v1096 = vunpack.c.l.b16 %v1057
      %v1097 = vunpack.c.l.b16 %v1058
      %v1098 = vunpack.c.l.b16 %v1059
      %v1099 = vunpack.c.l.b16 %v1060
      %v1100 = vunpack.c.l.b16 %v1061
      %v1101 = vunpack.c.l.b16 %v1062
      %v1102 = vunpack.c.l.b16 %v1063
      %v1103 = vunpack.c.l.b16 %v1064
      %v1104 = vunpack.c.l.b16 %v1065
      %v1105 = vunpack.c.l.b16 %v1066
      %v1106 = vpack.c.b16 %v1091, %v1090
      %v1107 = vpack.c.b16 %v1093, %v1092
      %v1108 = vpack.c.b16 %v1095, %v1094
      %v1109 = vpack.c.b16 %v1097, %v1096
      %v1110 = vpack.c.b16 %v1099, %v1098
      %v1111 = vpack.c.b16 %v1101, %v1100
      %v1112 = vpack.c.b16 %v1103, %v1102
      %v1113 = vpack.c.b16 %v1105, %v1104
      %1122 = vmatprep.subr.bf16.mxu0 0
      %1123 = vmatpush1.bf16.msra.mxu0 %v1106
      %1124 = vmatprep.subr.bf16.mxu0 0
      %1125 = vmatpush1.bf16.msra.mxu0 %v1107
      %1126 = vmatprep.subr.bf16.mxu0 0
      %1127 = vmatpush1.bf16.msra.mxu0 %v1108
      %1128 = vmatprep.subr.bf16.mxu0 0
      %1129 = vmatpush1.bf16.msra.mxu0 %v1109
      %1130 = vmatprep.subr.bf16.mxu0 0
      %1131 = vmatpush1.bf16.msra.mxu0 %v1110
      %1132 = vmatprep.subr.bf16.mxu0 0
      %1133 = vmatpush1.bf16.msra.mxu0 %v1111
      %1134 = vmatprep.subr.bf16.mxu0 0
      %1135 = vmatpush1.bf16.msra.mxu0 %v1112
      %1136 = vmatprep.subr.bf16.mxu0 0
      %1137 = vmatpush1.bf16.msra.mxu0 %v1113
      %1138 = vmatprep.subr.bf16.mxu0 0
      %1139 = vmatpush1.bf16.msra.mxu0 0
      %1140 = vmatprep.subr.bf16.mxu0 0
      %1141 = vmatpush1.bf16.msra.mxu0 0
      %1142 = vmatprep.subr.bf16.mxu0 0
      %1143 = vmatpush1.bf16.msra.mxu0 0
      %1144 = vmatprep.subr.bf16.mxu0 0
      %1145 = vmatpush1.bf16.msra.mxu0 0
      %1146 = vmatprep.subr.bf16.mxu0 0
      %1147 = vmatpush1.bf16.msra.mxu0 0
      %1148 = vmatprep.subr.bf16.mxu0 0
      %1149 = vmatpush1.bf16.msra.mxu0 0
      %1150 = vmatprep.subr.bf16.mxu0 0
      %1151 = vmatpush1.bf16.msra.mxu0 0
      %1152 = vmatprep.subr.bf16.mxu0 0
      %1153 = vmatpush1.bf16.msra.mxu0 0
      %1154 = vmatprep.mubr.bf16.mxu0 0
      %1155 = vmatmul.mubr.bf16.gmra.mrb[0].mxu0 %v1043
      %v1156 = vpop.f32.mrb[0].mxu0
      %v1157 = vadd.f32 %v1072, %v1156
      %v1158 = vpop.f32.mrb[0].mxu0
      %v1159 = vpop.f32.mrb[0].mxu0
      %v1160 = vadd.f32 %v1072, %v1159
      %v1161 = vpop.f32.mrb[0].mxu0
      %1162 = vmatprep.mubr.bf16.mxu0 0
      %1163 = vmatmul.mubr.bf16.gmra.mrb[0].mxu0 %v1044
      %v1164 = vpop.f32.mrb[0].mxu0
      %v1165 = vadd.f32 %v1072, %v1164
      %v1166 = vpop.f32.mrb[0].mxu0
      %v1167 = vpop.f32.mrb[0].mxu0
      %v1168 = vadd.f32 %v1072, %v1167
      %v1169 = vpop.f32.mrb[0].mxu0
      %1170 = vmatprep.mubr.bf16.mxu0 0
      %1171 = vmatmul.mubr.bf16.gmra.mrb[0].mxu0 %v1045
      %v1172 = vpop.f32.mrb[0].mxu0
      %v1173 = vadd.f32 %v1072, %v1172
      %v1174 = vpop.f32.mrb[0].mxu0
      %v1175 = vpop.f32.mrb[0].mxu0
      %v1176 = vadd.f32 %v1072, %v1175
      %v1177 = vpop.f32.mrb[0].mxu0
      %1178 = vmatprep.mubr.bf16.mxu0 0
      %1179 = vmatmul.mubr.bf16.gmra.mrb[0].mxu0 %v1046
      %v1180 = vpop.f32.mrb[0].mxu0
      %v1181 = vadd.f32 %v1072, %v1180
      %v1182 = vpop.f32.mrb[0].mxu0
      %v1183 = vpop.f32.mrb[0].mxu0
      %v1184 = vadd.f32 %v1072, %v1183
      %v1185 = vpop.f32.mrb[0].mxu0
      %1186 = vmatprep.mubr.bf16.mxu0 0
      %1187 = vmatmul.mubr.bf16.gmra.mrb[0].mxu0 %v1047
      %v1188 = vpop.f32.mrb[0].mxu0
      %v1189 = vadd.f32 %v1072, %v1188
      %v1190 = vpop.f32.mrb[0].mxu0
      %v1191 = vpop.f32.mrb[0].mxu0
      %v1192 = vadd.f32 %v1072, %v1191
      %v1193 = vpop.f32.mrb[0].mxu0
      %1194 = vmatprep.mubr.bf16.mxu0 0
      %1195 = vmatmul.mubr.bf16.gmra.mrb[0].mxu0 %v1048
      %v1196 = vpop.f32.mrb[0].mxu0
      %v1197 = vadd.f32 %v1072, %v1196
      %v1198 = vpop.f32.mrb[0].mxu0
      %v1199 = vpop.f32.mrb[0].mxu0
      %v1200 = vadd.f32 %v1072, %v1199
      %v1201 = vpop.f32.mrb[0].mxu0
      %1202 = vmatprep.mubr.bf16.mxu0 0
      %1203 = vmatmul.mubr.bf16.gmra.mrb[0].mxu0 %v1049
      %v1204 = vpop.f32.mrb[0].mxu0
      %v1205 = vadd.f32 %v1072, %v1204
      %v1206 = vpop.f32.mrb[0].mxu0
      %v1207 = vpop.f32.mrb[0].mxu0
      %v1208 = vadd.f32 %v1072, %v1207
      %v1209 = vpop.f32.mrb[0].mxu0
      %1210 = vmatprep.mubr.bf16.mxu0 0
      %1211 = vmatmul.mubr.bf16.gmra.mrb[0].mxu0 %v1050
      %v1212 = vpop.f32.mrb[0].mxu0
      %v1213 = vadd.f32 %v1072, %v1212
      %v1214 = vpop.f32.mrb[0].mxu0
      %v1215 = vpop.f32.mrb[0].mxu0
      %v1216 = vadd.f32 %v1072, %v1215
      %v1217 = vpop.f32.mrb[0].mxu0
      %1218 = vdwg.mxu0
      %v1219 = vmax.f32 %v1157, 0.0
      %v1220 = vmax.f32 %v1160, 0.0
      %v1221 = vmax.f32 %v1165, 0.0
      %v1222 = vmax.f32 %v1168, 0.0
      %v1223 = vmax.f32 %v1173, 0.0
      %v1224 = vmax.f32 %v1176, 0.0
      %v1225 = vmax.f32 %v1181, 0.0
      %v1226 = vmax.f32 %v1184, 0.0
      %v1227 = vmax.f32 %v1189, 0.0
      %v1228 = vmax.f32 %v1192, 0.0
      %v1229 = vmax.f32 %v1197, 0.0
      %v1230 = vmax.f32 %v1200, 0.0
      %v1231 = vmax.f32 %v1205, 0.0
      %v1232 = vmax.f32 %v1208, 0.0
      %v1233 = vmax.f32 %v1213, 0.0
      %v1234 = vmax.f32 %v1216, 0.0
      %v1235 = vpack.c.bf16 %v1220, %v1219
      %v1236 = vpack.c.bf16 %v1222, %v1221
      %v1237 = vpack.c.bf16 %v1224, %v1223
      %v1238 = vpack.c.bf16 %v1226, %v1225
      %v1239 = vpack.c.bf16 %v1228, %v1227
      %v1240 = vpack.c.bf16 %v1230, %v1229
      %v1241 = vpack.c.bf16 %v1232, %v1231
      %v1242 = vpack.c.bf16 %v1234, %v1233
      %v1243 = vld [vmem:[%s11] sm:$0xf]
      %v1244 = vld [vmem:[%s11 + $0x4] sm:$0xf]
      %v1245 = vld [vmem:[%s11 + $0x8] sm:$0xf]
      %v1246 = vld [vmem:[%s11 + $0xc] sm:$0xf]
      %v1247 = vld [vmem:[%s11 + $0x10] sm:$0xf]
      %v1248 = vld [vmem:[%s11 + $0x14] sm:$0xf]
      %v1249 = vld [vmem:[%s11 + $0x18] sm:$0xf]
      %v1250 = vld [vmem:[%s11 + $0x1c] sm:$0xf]
      %v1251 = vld [vmem:[%s11 + $0x20] sm:$0xf]
      %v1252 = vld [vmem:[%s11 + $0x24] sm:$0xf]
      %v1253 = vld [vmem:[%s11 + $0x28] sm:$0xf]
      %v1254 = vld [vmem:[%s11 + $0x2c] sm:$0xf]
      %v1255 = vld [vmem:[%s11 + $0x30] sm:$0xf]
      %v1256 = vld [vmem:[%s11 + $0x34] sm:$0xf]
      %v1257 = vld [vmem:[%s11 + $0x38] sm:$0xf]
      %v1258 = vld [vmem:[%s11 + $0x3c] sm:$0xf]
      %v1259 = vld [vmem:[%s12] sm:$0x1]
      %v1261 = vlaneseq
      %v1262 = vshrl.u32 %v1261, 7
      %v1263 = vsub.s32 0, %v1262
      %v1264 = vrot.slane %v1259, %v1263
      %v1282 = vunpack.c.l.b16 %v1243
      %v1283 = vunpack.c.l.b16 %v1244
      %v1284 = vunpack.c.l.b16 %v1245
      %v1285 = vunpack.c.l.b16 %v1246
      %v1286 = vunpack.c.l.b16 %v1247
      %v1287 = vunpack.c.l.b16 %v1248
      %v1288 = vunpack.c.l.b16 %v1249
      %v1289 = vunpack.c.l.b16 %v1250
      %v1290 = vunpack.c.l.b16 %v1251
      %v1291 = vunpack.c.l.b16 %v1252
      %v1292 = vunpack.c.l.b16 %v1253
      %v1293 = vunpack.c.l.b16 %v1254
      %v1294 = vunpack.c.l.b16 %v1255
      %v1295 = vunpack.c.l.b16 %v1256
      %v1296 = vunpack.c.l.b16 %v1257
      %v1297 = vunpack.c.l.b16 %v1258
      %v1298 = vpack.c.b16 %v1283, %v1282
      %v1299 = vpack.c.b16 %v1285, %v1284
      %v1300 = vpack.c.b16 %v1287, %v1286
      %v1301 = vpack.c.b16 %v1289, %v1288
      %v1302 = vpack.c.b16 %v1291, %v1290
      %v1303 = vpack.c.b16 %v1293, %v1292
      %v1304 = vpack.c.b16 %v1295, %v1294
      %v1305 = vpack.c.b16 %v1297, %v1296
      %1314 = vmatprep.subr.bf16.mxu0 0
      %1315 = vmatpush1.bf16.msra.mxu0 %v1298
      %1316 = vmatprep.subr.bf16.mxu0 0
      %1317 = vmatpush1.bf16.msra.mxu0 %v1299
      %1318 = vmatprep.subr.bf16.mxu0 0
      %1319 = vmatpush1.bf16.msra.mxu0 %v1300
      %1320 = vmatprep.subr.bf16.mxu0 0
      %1321 = vmatpush1.bf16.msra.mxu0 %v1301
      %1322 = vmatprep.subr.bf16.mxu0 0
      %1323 = vmatpush1.bf16.msra.mxu0 %v1302
      %1324 = vmatprep.subr.bf16.mxu0 0
      %1325 = vmatpush1.bf16.msra.mxu0 %v1303
      %1326 = vmatprep.subr.bf16.mxu0 0
      %1327 = vmatpush1.bf16.msra.mxu0 %v1304
      %1328 = vmatprep.subr.bf16.mxu0 0
      %1329 = vmatpush1.bf16.msra.mxu0 %v1305
      %1330 = vmatprep.subr.bf16.mxu0 0
      %1331 = vmatpush1.bf16.msra.mxu0 0
      %1332 = vmatprep.subr.bf16.mxu0 0
      %1333 = vmatpush1.bf16.msra.mxu0 0
      %1334 = vmatprep.subr.bf16.mxu0 0
      %1335 = vmatpush1.bf16.msra.mxu0 0
      %1336 = vmatprep.subr.bf16.mxu0 0
      %1337 = vmatpush1.bf16.msra.mxu0 0
      %1338 = vmatprep.subr.bf16.mxu0 0
      %1339 = vmatpush1.bf16.msra.mxu0 0
      %1340 = vmatprep.subr.bf16.mxu0 0
      %1341 = vmatpush1.bf16.msra.mxu0 0
      %1342 = vmatprep.subr.bf16.mxu0 0
      %1343 = vmatpush1.bf16.msra.mxu0 0
      %1344 = vmatprep.subr.bf16.mxu0 0
      %1345 = vmatpush1.bf16.msra.mxu0 0
      %1346 = vmatprep.mubr.bf16.mxu0 0
      %1347 = vmatmul.mubr.bf16.gmra.mrb[0].mxu0 %v1235
      %v1348 = vpop.f32.mrb[0].mxu0
      %v1349 = vadd.f32 %v1264, %v1348
      %v1350 = vpop.f32.mrb[0].mxu0
      %v1351 = vpop.f32.mrb[0].mxu0
      %v1352 = vadd.f32 %v1264, %v1351
      %v1353 = vpop.f32.mrb[0].mxu0
      %1354 = vmatprep.mubr.bf16.mxu0 0
      %1355 = vmatmul.mubr.bf16.gmra.mrb[0].mxu0 %v1236
      %v1356 = vpop.f32.mrb[0].mxu0
      %v1357 = vadd.f32 %v1264, %v1356
      %v1358 = vpop.f32.mrb[0].mxu0
      %v1359 = vpop.f32.mrb[0].mxu0
      %v1360 = vadd.f32 %v1264, %v1359
      %v1361 = vpop.f32.mrb[0].mxu0
      %1362 = vmatprep.mubr.bf16.mxu0 0
      %1363 = vmatmul.mubr.bf16.gmra.mrb[0].mxu0 %v1237
      %v1364 = vpop.f32.mrb[0].mxu0
      %v1365 = vadd.f32 %v1264, %v1364
      %v1366 = vpop.f32.mrb[0].mxu0
      %v1367 = vpop.f32.mrb[0].mxu0
      %v1368 = vadd.f32 %v1264, %v1367
      %v1369 = vpop.f32.mrb[0].mxu0
      %1370 = vmatprep.mubr.bf16.mxu0 0
      %1371 = vmatmul.mubr.bf16.gmra.mrb[0].mxu0 %v1238
      %v1372 = vpop.f32.mrb[0].mxu0
      %v1373 = vadd.f32 %v1264, %v1372
      %v1374 = vpop.f32.mrb[0].mxu0
      %v1375 = vpop.f32.mrb[0].mxu0
      %v1376 = vadd.f32 %v1264, %v1375
      %v1377 = vpop.f32.mrb[0].mxu0
      %1378 = vmatprep.mubr.bf16.mxu0 0
      %1379 = vmatmul.mubr.bf16.gmra.mrb[0].mxu0 %v1239
      %v1380 = vpop.f32.mrb[0].mxu0
      %v1381 = vadd.f32 %v1264, %v1380
      %v1382 = vpop.f32.mrb[0].mxu0
      %v1383 = vpop.f32.mrb[0].mxu0
      %v1384 = vadd.f32 %v1264, %v1383
      %v1385 = vpop.f32.mrb[0].mxu0
      %1386 = vmatprep.mubr.bf16.mxu0 0
      %1387 = vmatmul.mubr.bf16.gmra.mrb[0].mxu0 %v1240
      %v1388 = vpop.f32.mrb[0].mxu0
      %v1389 = vadd.f32 %v1264, %v1388
      %v1390 = vpop.f32.mrb[0].mxu0
      %v1391 = vpop.f32.mrb[0].mxu0
      %v1392 = vadd.f32 %v1264, %v1391
      %v1393 = vpop.f32.mrb[0].mxu0
      %1394 = vmatprep.mubr.bf16.mxu0 0
      %1395 = vmatmul.mubr.bf16.gmra.mrb[0].mxu0 %v1241
      %v1396 = vpop.f32.mrb[0].mxu0
      %v1397 = vadd.f32 %v1264, %v1396
      %v1398 = vpop.f32.mrb[0].mxu0
      %v1399 = vpop.f32.mrb[0].mxu0
      %v1400 = vadd.f32 %v1264, %v1399
      %v1401 = vpop.f32.mrb[0].mxu0
      %1402 = vmatprep.mubr.bf16.mxu0 0
      %1403 = vmatmul.mubr.bf16.gmra.mrb[0].mxu0 %v1242
      %v1404 = vpop.f32.mrb[0].mxu0
      %v1405 = vadd.f32 %v1264, %v1404
      %v1406 = vpop.f32.mrb[0].mxu0
      %v1407 = vpop.f32.mrb[0].mxu0
      %v1408 = vadd.f32 %v1264, %v1407
      %v1409 = vpop.f32.mrb[0].mxu0
      %1410 = vdwg.mxu0
      %1411 = vst [vmem:[#allocation3] sm:$0xff] %v1349
      %1412 = vst [vmem:[#allocation3 + $0x8] sm:$0xff] %v1352
      %1413 = vst [vmem:[#allocation3 + $0x10] sm:$0xff] %v1357
      %1414 = vst [vmem:[#allocation3 + $0x18] sm:$0xff] %v1360
      %1415 = vst [vmem:[#allocation3 + $0x20] sm:$0xff] %v1365
      %1416 = vst [vmem:[#allocation3 + $0x28] sm:$0xff] %v1368
      %1417 = vst [vmem:[#allocation3 + $0x30] sm:$0xff] %v1373
      %1418 = vst [vmem:[#allocation3 + $0x38] sm:$0xff] %v1376
      %1419 = vst [vmem:[#allocation3 + $0x40] sm:$0xff] %v1381
      %1420 = vst [vmem:[#allocation3 + $0x48] sm:$0xff] %v1384
      %1421 = vst [vmem:[#allocation3 + $0x50] sm:$0xff] %v1389
      %1422 = vst [vmem:[#allocation3 + $0x58] sm:$0xff] %v1392
      %1423 = vst [vmem:[#allocation3 + $0x60] sm:$0xff] %v1397
      %1424 = vst [vmem:[#allocation3 + $0x68] sm:$0xff] %v1400
      %1425 = vst [vmem:[#allocation3 + $0x70] sm:$0xff] %v1405
      %1426 = vst [vmem:[#allocation3 + $0x78] sm:$0xff] %v1408
    $region61: #{_forward_impl.3} parent=1 // pred_fallthru
      _
    // Predicated region
    $region62: #{_forward_impl.3} parent=1 // pred_check
      _
    $region63: #{_forward_impl.3} parent=1 // pred_check_branch
      %1428 = sbr.rel (0) target = $region65
    $region64: #{_forward_impl.3} parent=1 // pred_region
      %s1430 = ssub.s32 2048, 2048
      %1431 = vsyncadd [#allocation4], %s1430
      %s1432 = sshll.u32 [#allocation3], 4
      %s1433 = int_to_ptr.vmem [resolvable:$true] %s1432
      %1438 = dma.vmem_to_hbm [thread:$0]  %s1433, 2048, %s13, [#allocation4], 128, 128, 8
    $region65: #{_forward_impl.3} parent=1 // pred_fallthru
      _
    // Predicated region
    $region66: #{_forward_impl.3} parent=1 // pred_check
      _
    $region67: #{_forward_impl.3} parent=1 // pred_check_branch
      %1440 = sbr.rel (0) target = $region69
    $region68: #{_forward_impl.3} parent=1 // pred_region
      %1441 = dma.done [#allocation4], 2048
    $region69: #{_forward_impl.3} parent=1 // pred_fallthru
      _
    %1442 = vsyncpa [#allocation4], 1

</llo_original>
